<compile_context>
chip_gen: v6e
topology: v6e:2x2x1
jax: 0.10.0
libtpu: 0.0.40
codegen_flags: <defaults>
</compile_context>

<pallas_src>
import functools
import math

import jax
import jax.numpy as jnp
from jax.experimental import pallas as pl
from jax.experimental.pallas import tpu as pltpu


# ----------------------------- shared helpers --------------------------------

def _layernorm(x, eps=1e-6):
    mean = jnp.mean(x, axis=-1, keepdims=True)
    var = jnp.mean((x - mean) ** 2, axis=-1, keepdims=True)
    return (x - mean) * jax.lax.rsqrt(var + eps)


def _rmsnorm(x, w, eps=1e-6):
    var = jnp.mean(x * x, axis=-1, keepdims=True)
    return x * jax.lax.rsqrt(var + eps) * w


def _round_up(n, m):
    return ((n + m - 1) // m) * m


def _spec(shape, index_map, single_buffered=False):
    """BlockSpec helper; constant-index weights request single buffering."""
    if single_buffered:
        try:
            return pl.BlockSpec(shape, index_map,
                                pipeline_mode=pl.Buffered(buffer_count=1))
        except (TypeError, AttributeError):
            pass
    return pl.BlockSpec(shape, index_map)


# ------------------------- kernel 1: norm + QKV + RoPE ------------------------

def _qkv_kernel(num_heads, head_dim,
                x_ref, rope_ref, shift_ref, scale_ref,
                wqkv_ref, bqkv_ref, rms_ref, avg_ref, expand_ref,
                q_out, k_out, v_out):
    H, Dh = num_heads, head_dim
    C = H * Dh
    f32, bf16 = jnp.float32, jnp.bfloat16

    x = x_ref[0].astype(f32)                                         # [Ts, C]
    nx = (_layernorm(x) * (1.0 + scale_ref[0]) + shift_ref[0]).astype(bf16)
    qkv = jnp.dot(nx, wqkv_ref[...],
                  preferred_element_type=f32) + bqkv_ref[...]        # [Ts, 3C] f32

    # --- q|k: per-head RMSNorm, vectorized via block-indicator matmuls ---------
    qk = qkv[:, :2 * C]
    msq = jnp.dot(qk * qk, avg_ref[...], preferred_element_type=f32)  # [Ts, 2H]
    inv = jax.lax.rsqrt(msq + 1e-6)
    qk = qk * jnp.dot(inv, expand_ref[...], preferred_element_type=f32)
    qk = qk * rms_ref[...]     # rms weights; q half also carries 1/sqrt(Dh)

    # --- q|k: RoPE as a vectorized per-head rotate-half on the 2D layout -------
    # Channels are de-interleaved (even|odd) per head in the wrapper, and the
    # rotation sign is folded into the sin table, so the rotation partner of
    # channel p is p +/- Dh/2 -> two global lane shifts + one select.
    cos = rope_ref[0][:, :Dh]
    sin = rope_ref[0][:, Dh:]
    cos_full = jnp.concatenate([cos] * (2 * H), axis=-1)              # [Ts, 2C]
    sin_full = jnp.concatenate([sin] * (2 * H), axis=-1)
    half = Dh // 2
    rot_l = jnp.concatenate([qk[:, half:], qk[:, :half]], axis=-1)    # x[p + Dh/2]
    rot_r = jnp.concatenate([qk[:, -half:], qk[:, :-half]], axis=-1)  # x[p - Dh/2]
    chan = jax.lax.broadcasted_iota(jnp.int32, (1, 2 * C), 1)
    qk_rot = jnp.where(chan % Dh < half, rot_l, rot_r)
    qk = (qk * cos_full + qk_rot * sin_full).astype(bf16)
    v = qkv[:, 2 * C:].astype(bf16)

    # --- split heads into the [H, Ts, Dh] attention layout (plain lane slices) -
    for h in range(H):
        q_out[0, h] = qk[:, h * Dh:(h + 1) * Dh]
        k_out[0, h] = qk[:, C + h * Dh:C + (h + 1) * Dh]
        v_out[0, h] = v[:, h * Dh:(h + 1) * Dh]


# ------------------------- kernel 2: flash attention --------------------------

def _flash_attn_kernel(seq_len, padded, head_group,
                       q_ref, k_ref, v_ref, o_ref,
                       m_sc, l_sc, acc_sc):
    ki = pl.program_id(2)
    n_kv = pl.num_programs(2)
    H = q_ref.shape[1]
    tkv = k_ref.shape[2]

    @pl.when(ki == 0)
    def _init():
        m_sc[...] = jnp.full(m_sc.shape, -jnp.inf, jnp.float32)
        l_sc[...] = jnp.zeros(l_sc.shape, jnp.float32)
        acc_sc[...] = jnp.zeros(acc_sc.shape, jnp.float32)

    if padded:  # static: only emitted when the sequence actually has padding
        col = jax.lax.broadcasted_iota(jnp.int32, (1, 1, tkv), 2) + ki * tkv
        valid = col < seq_len

    # Heads in groups: caps the [hg, Tq, Tkv] f32 logits/probs temporaries.
    for g0 in range(0, H, head_group):
        g1 = min(g0 + head_group, H)
        s = jnp.einsum('hqd,hkd->hqk', q_ref[0, g0:g1], k_ref[0, g0:g1],
                       preferred_element_type=jnp.float32)
        if padded:
            s = jnp.where(valid, s, -1e30)
        m_prev = m_sc[g0:g1]
        m_new = jnp.maximum(m_prev, jnp.max(s, axis=-1, keepdims=True))
        alpha = jnp.exp(m_prev - m_new)
        p = jnp.exp(s - m_new)
        l_sc[g0:g1] = alpha * l_sc[g0:g1] + jnp.sum(p, axis=-1, keepdims=True)
        acc_sc[g0:g1] = alpha * acc_sc[g0:g1] + jnp.einsum(
            'hqk,hkd->hqd', p.astype(jnp.bfloat16), v_ref[0, g0:g1],
            preferred_element_type=jnp.float32)
        m_sc[g0:g1] = m_new

    @pl.when(ki == n_kv - 1)
    def _finalize():
        o_ref[0] = (acc_sc[...] * pl.reciprocal(l_sc[...], approx=True)
                    ).astype(o_ref.dtype)


# --------------- kernel 3: streamed MLP + proj_out + gate + residual ----------

def _mlp_out_kernel(num_heads, head_dim,
                    x_ref, attn_ref, shift_ref, scale_ref, gate_ref,
                    wouta_ref, bout_ref, wmlp_ref, bmlp_ref, woutm_ref,
                    o_ref, nx_sc, acc_sc):
    H, Dh = num_heads, head_dim
    mi = pl.program_id(2)
    n_m = pl.num_programs(2)
    f32, bf16 = jnp.float32, jnp.bfloat16

    # Per-(batch, seq-tile) prologue: modulated LayerNorm (reused by every M tile)
    # and the attention half of proj_out, accumulated per head on the MXU.
    @pl.when(mi == 0)
    def _init():
        x = x_ref[0].astype(f32)
        nx_sc[...] = (_layernorm(x) * (1.0 + scale_ref[0]) + shift_ref[0]).astype(bf16)
        acc = jnp.zeros(acc_sc.shape, f32) + bout_ref[...]
        for h in range(H):
            acc = acc + jnp.dot(attn_ref[0, h], wouta_ref[h * Dh:(h + 1) * Dh, :],
                                preferred_element_type=f32)
        acc_sc[...] = acc

    # Streamed MLP tile: gelu(nx @ w_mlp[:, m]) @ w_out_mlp[m, :]
    h_m = jnp.dot(nx_sc[...], wmlp_ref[...],
                  preferred_element_type=f32) + bmlp_ref[...]
    h_m = jax.nn.gelu(h_m, approximate=True).astype(bf16)
    acc_sc[...] += jnp.dot(h_m, woutm_ref[...], preferred_element_type=f32)

    @pl.when(mi == n_m - 1)
    def _finalize():
        out = gate_ref[0] * acc_sc[...] + x_ref[0].astype(f32)
        o_ref[0] = out.astype(o_ref.dtype)


# --------------------------------- wrapper -----------------------------------

def hunyuan_single_block(params, hidden_states, encoder_hidden_states, temb,
                         image_rotary_emb, *, num_heads, head_dim,
                         tile_seq=None, tile_kv=None, tile_m=None,
                         head_group=8, vmem_limit_bytes=None):
    """Pallas implementation of HunyuanVideoSingleTransformerBlock.forward
    (dense attention path, attention_mask == (None, None, None, None)).

    vmem_limit_bytes: tune per TPU generation (e.g. ~48MiB on v7x, ~100MiB on v6e/v5e).
    """
    B, S_img, C = hidden_states.shape
    S_txt = encoder_hidden_states.shape[1]
    S = S_img + S_txt
    M = params["w_mlp"].shape[1]
    H, Dh = num_heads, head_dim
    assert C == H * Dh and Dh % 2 == 0
    f32, bf16 = jnp.float32, jnp.bfloat16

    # --- tiling ---------------------------------------------------------------
    if tile_seq is None:
        tile_seq = min(256, _round_up(S, 8))
    if tile_kv is None:
        tile_kv = min(512, _round_up(S, tile_seq))
    tile_kv = _round_up(tile_kv, tile_seq)          # S_pad = round_up(S, tile_kv)
    if tile_m is None:
        tile_m = M if M <= 512 else 512
    assert tile_seq % 8 == 0 and tile_kv % tile_seq == 0 and M % tile_m == 0
    S_pad = _round_up(S, tile_kv)
    n_s, n_kv, n_m = S_pad // tile_seq, S_pad // tile_kv, M // tile_m
    padded = S_pad != S
    hg = max(1, min(head_group, H))

    def cparams(dims):
        return pltpu.CompilerParams(dimension_semantics=dims,
                                    vmem_limit_bytes=vmem_limit_bytes)

    # --- inputs: bf16 activations at the HBM boundary --------------------------
    x = jnp.concatenate([hidden_states, encoder_hidden_states], axis=1)
    if padded:
        x = jnp.pad(x, ((0, 0), (0, S_pad - S), (0, 0)))
    x = x.astype(bf16)

    # AdaLN-Zero modulation hoisted out of the kernels (tiny [B,C]@[C,3C] matmul).
    mod = jax.nn.silu(temb.astype(f32)) @ params["w_ada"] + params["b_ada"]
    shift, scale, gate = jnp.split(mod, 3, axis=-1)
    shift, scale, gate = (v[:, None, :].astype(f32) for v in (shift, scale, gate))

    # De-interleave q/k head channels (even|odd) so in-kernel RoPE is rotate-half.
    perm = jnp.concatenate([jnp.arange(0, Dh, 2), jnp.arange(1, Dh, 2)])
    gperm = (jnp.arange(H)[:, None] * Dh + perm[None, :]).reshape(-1)
    wq = params["wq"][:, gperm]
    bq = params["bq"][gperm]
    wk = params["wk"][:, gperm]
    bk = params["bk"][gperm]
    rms_q = params["rms_q"][perm]
    rms_k = params["rms_k"][perm]
    # Fuse Q, K, V projections into a single [C, 3C] matmul.
    wqkv = jnp.concatenate([wq, wk, params["wv"]], axis=1).astype(bf16)
    bqkv = jnp.concatenate([bq, bk, params["bv"]], axis=0)[None, :].astype(f32)

    # Per-channel RMSNorm weights over the q|k halves; softmax scale folded into q.
    sm_scale = 1.0 / math.sqrt(Dh)
    rms_full = jnp.concatenate([jnp.tile(rms_q * sm_scale, H),
                                jnp.tile(rms_k, H)])[None, :].astype(f32)   # [1, 2C]
    # Block-indicator matrices for vectorized per-head mean-of-squares / broadcast.
    head_ids = jnp.repeat(jnp.arange(2 * H), Dh)                             # [2C]
    avg = (head_ids[:, None] == jnp.arange(2 * H)[None, :]).astype(f32) / Dh  # [2C, 2H]
    expand = (jnp.arange(2 * H)[:, None] == head_ids[None, :]).astype(f32)    # [2H, 2C]

    # RoPE tables: permuted channels, rotation sign folded into sin, identity rows
    # (cos=1, sin=0) for text + padding tokens so RoPE applies to whole tiles.
    freqs = image_rotary_emb[0, :S_img].astype(f32)                          # [S_img, 2*Dh]
    cos_t = freqs[:, :Dh][:, perm]
    sin_t = freqs[:, Dh:][:, perm]
    sign = jnp.where(jnp.arange(Dh) < Dh // 2, -1.0, 1.0).astype(f32)
    sin_t = sin_t * sign
    pad_rows = S_pad - S_img
    cos_t = jnp.concatenate([cos_t, jnp.ones((pad_rows, Dh), f32)], axis=0)
    sin_t = jnp.concatenate([sin_t, jnp.zeros((pad_rows, Dh), f32)], axis=0)
    rope = jnp.concatenate([cos_t, sin_t], axis=-1)[None]                    # [1, S_pad, 2*Dh]

    row = lambda v: v[None, :].astype(f32)

    # ---------------------- kernel 1: QKV precompute ---------------------------
    q, k, v = pl.pallas_call(
        functools.partial(_qkv_kernel, H, Dh),
        out_shape=[jax.ShapeDtypeStruct((B, H, S_pad, Dh), bf16) for _ in range(3)],
        grid=(B, n_s),
        in_specs=[
            pl.BlockSpec((1, tile_seq, C), lambda b, si: (b, si, 0)),        # x
            pl.BlockSpec((1, tile_seq, 2 * Dh), lambda b, si: (0, si, 0)),   # rope
            _spec((1, 1, C), lambda b, si: (b, 0, 0), True),                 # shift
            _spec((1, 1, C), lambda b, si: (b, 0, 0), True),                 # scale
            _spec((C, 3 * C), lambda b, si: (0, 0), True),                   # wqkv (bf16)
            _spec((1, 3 * C), lambda b, si: (0, 0), True),                   # bqkv
            _spec((1, 2 * C), lambda b, si: (0, 0), True),                   # rms weights
            _spec((2 * C, 2 * H), lambda b, si: (0, 0), True),               # head-avg
            _spec((2 * H, 2 * C), lambda b, si: (0, 0), True),               # head-expand
        ],
        out_specs=[pl.BlockSpec((1, H, tile_seq, Dh), lambda b, si: (b, 0, si, 0))
                   for _ in range(3)],
        compiler_params=cparams(("parallel", "parallel")),
    )(x, rope, shift, scale, wqkv, bqkv, rms_full, avg, expand)

    # ---------------------- kernel 2: flash attention --------------------------
    attn = pl.pallas_call(
        functools.partial(_flash_attn_kernel, S, padded, hg),
        out_shape=jax.ShapeDtypeStruct((B, H, S_pad, Dh), bf16),
        grid=(B, n_s, n_kv),
        in_specs=[
            pl.BlockSpec((1, H, tile_seq, Dh), lambda b, qi, ki: (b, 0, qi, 0)),
            pl.BlockSpec((1, H, tile_kv, Dh), lambda b, qi, ki: (b, 0, ki, 0)),
            pl.BlockSpec((1, H, tile_kv, Dh), lambda b, qi, ki: (b, 0, ki, 0)),
        ],
        out_specs=pl.BlockSpec((1, H, tile_seq, Dh), lambda b, qi, ki: (b, 0, qi, 0)),
        scratch_shapes=[
            pltpu.VMEM((H, tile_seq, 1), f32),     # running max
            pltpu.VMEM((H, tile_seq, 1), f32),     # running sum
            pltpu.VMEM((H, tile_seq, Dh), f32),    # accumulator
        ],
        compiler_params=cparams(("parallel", "parallel", "arbitrary")),
    )(q, k, v)

    # -------- kernel 3: streamed MLP + fused output projection + residual ------
    w_out_a = params["w_out"][:C].astype(bf16)
    w_out_m = params["w_out"][C:].astype(bf16)

    out = pl.pallas_call(
        functools.partial(_mlp_out_kernel, H, Dh),
        out_shape=jax.ShapeDtypeStruct((B, S_pad, C), bf16),
        grid=(B, n_s, n_m),
        in_specs=[
            pl.BlockSpec((1, tile_seq, C), lambda b, si, mi: (b, si, 0)),          # x
            pl.BlockSpec((1, H, tile_seq, Dh), lambda b, si, mi: (b, 0, si, 0)),   # attn
            _spec((1, 1, C), lambda b, si, mi: (b, 0, 0), True),                   # shift
            _spec((1, 1, C), lambda b, si, mi: (b, 0, 0), True),                   # scale
            _spec((1, 1, C), lambda b, si, mi: (b, 0, 0), True),                   # gate
            _spec((C, C), lambda b, si, mi: (0, 0), True),                         # w_out attn half
            _spec((1, C), lambda b, si, mi: (0, 0), True),                         # b_out
            pl.BlockSpec((C, tile_m), lambda b, si, mi: (0, mi)),                  # w_mlp (streamed)
            pl.BlockSpec((1, tile_m), lambda b, si, mi: (0, mi)),                  # b_mlp (streamed)
            pl.BlockSpec((tile_m, C), lambda b, si, mi: (mi, 0)),                  # w_out mlp half (streamed)
        ],
        out_specs=pl.BlockSpec((1, tile_seq, C), lambda b, si, mi: (b, si, 0)),
        scratch_shapes=[
            pltpu.VMEM((tile_seq, C), bf16),       # modulated LN(x), reused per M tile
            pltpu.VMEM((tile_seq, C), f32),        # proj_out accumulator
        ],
        compiler_params=cparams(("parallel", "parallel", "arbitrary")),
    )(x, attn, shift, scale, gate, w_out_a, row(params["b_out"]),
      params["w_mlp"].astype(bf16), row(params["b_mlp"]), w_out_m)

    out = out[:, :S]
    return out[:, :S_img], out[:, S_img:]


# ------------------------------ pure-JAX reference ----------------------------

def _reference(params, hidden, encoder, temb, freqs, *, num_heads, head_dim):
    B, S_img, C = hidden.shape
    x = jnp.concatenate([hidden, encoder], axis=1)
    residual = x
    e = jax.nn.silu(temb)[:, None, :]
    mod = e @ params["w_ada"] + params["b_ada"]
    shift, scale, gate = jnp.split(mod, 3, axis=-1)
    norm_x = _layernorm(x) * (1.0 + scale) + shift
    mlp = jax.nn.gelu(norm_x @ params["w_mlp"] + params["b_mlp"], approximate=True)

    def heads(z):
        return z.reshape(B, -1, num_heads, head_dim)

    q = heads(norm_x @ params["wq"] + params["bq"])
    k = heads(norm_x @ params["wk"] + params["bk"])
    v = heads(norm_x @ params["wv"] + params["bv"])
    q = _rmsnorm(q, params["rms_q"])
    k = _rmsnorm(k, params["rms_k"])

    def rope(z):  # z: [B, S_img, H, Dh], interleaved-pair convention
        cos, sin = jnp.split(freqs[:, :S_img, None, :], 2, axis=-1)
        zr = z.reshape(*z.shape[:-1], -1, 2)
        real, imag = zr[..., 0], zr[..., 1]
        rot = jnp.stack([-imag, real], axis=-1).reshape(z.shape)
        return z * cos + rot * sin

    q = jnp.concatenate([rope(q[:, :S_img]), q[:, S_img:]], axis=1)
    k = jnp.concatenate([rope(k[:, :S_img]), k[:, S_img:]], axis=1)

    s = jnp.einsum("bqhd,bkhd->bhqk", q, k) / math.sqrt(head_dim)
    p = jax.nn.softmax(s, axis=-1)
    attn = jnp.einsum("bhqk,bkhd->bqhd", p, v).reshape(B, -1, C)

    cat = jnp.concatenate([attn, mlp], axis=-1)
    out = gate * (cat @ params["w_out"] + params["b_out"]) + residual
    return out[:, :S_img], out[:, S_img:]


# ----------------------------------- main -------------------------------------

if __name__ == "__main__":
    # small shapes: heads=2, head_dim=64 -> hidden=128, mlp_ratio=4 -> mlp_dim=512
    B, S_img, S_txt = 2, 16, 8
    H, Dh = 2, 64
    C = H * Dh
    M = int(C * 4.0)

    key = jax.random.PRNGKey(0)
    ks = jax.random.split(key, 16)

    def w(k, shape, s=0.05):
        return jax.random.normal(k, shape, jnp.float32) * s

    params = {
        "w_ada": w(ks[0], (C, 3 * C)), "b_ada": w(ks[1], (3 * C,)),
        "wq": w(ks[2], (C, C)), "bq": w(ks[3], (C,)),
        "wk": w(ks[4], (C, C)), "bk": w(ks[5], (C,)),
        "wv": w(ks[6], (C, C)), "bv": w(ks[7], (C,)),
        "rms_q": 1.0 + 0.1 * jax.random.normal(ks[8], (Dh,), jnp.float32),
        "rms_k": 1.0 + 0.1 * jax.random.normal(ks[9], (Dh,), jnp.float32),
        "w_mlp": w(ks[10], (C, M)), "b_mlp": w(ks[11], (M,)),
        "w_out": w(ks[12], (C + M, C)), "b_out": w(ks[13], (C,)),
    }

    hidden = jax.random.normal(ks[14], (B, S_img, C), jnp.float32)
    encoder = jax.random.normal(ks[15], (B, S_txt, C), jnp.float32)
    temb = jax.random.normal(jax.random.PRNGKey(1), (B, C), jnp.float32)

    # rotary embedding: [1, S_img, 2*Dh] = concat([cos, sin], -1), interleaved pairs
    pos = jnp.arange(S_img, dtype=jnp.float32)
    inv_freq = 1.0 / (10000.0 ** (jnp.arange(0, Dh, 2, dtype=jnp.float32) / Dh))
    ang = pos[:, None] * inv_freq[None, :]
    cos = jnp.repeat(jnp.cos(ang), 2, axis=-1)
    sin = jnp.repeat(jnp.sin(ang), 2, axis=-1)
    image_rotary_emb = jnp.concatenate([cos, sin], axis=-1)[None]   # [1, S_img, 2*Dh]

    # S = 24, tile_kv = 16 -> S_pad = 32 (exercises the padded-KV mask path);
    # M = 512, tile_m = 128 -> 4 streamed MLP-weight tiles.
    out_img, out_txt = hunyuan_single_block(
        params, hidden, encoder, temb, image_rotary_emb,
        num_heads=H, head_dim=Dh, tile_seq=8, tile_kv=16, tile_m=128)
    out_img = jax.block_until_ready(out_img)
    out_txt = jax.block_until_ready(out_txt)

    ref_img, ref_txt = _reference(
        params, hidden, encoder, temb, image_rotary_emb, num_heads=H, head_dim=Dh)

    assert out_img.shape == (B, S_img, C) and out_txt.shape == (B, S_txt, C)
    assert jnp.allclose(out_img.astype(jnp.float32), ref_img, rtol=2e-2, atol=2e-2)
    assert jnp.allclose(out_txt.astype(jnp.float32), ref_txt, rtol=2e-2, atol=2e-2)

    print("KERNEL_OK")
</pallas_src>

<mosaic_0001>
module attributes {stable_mosaic.version = 11 : i64} {
  func.func @_qkv_kernel(%arg0: i32, %arg1: i32, %arg2: memref<1x8x128xbf16, #tpu.memory_space<vmem>>, %arg3: memref<1x8x128xf32, #tpu.memory_space<vmem>>, %arg4: memref<1x1x128xf32, #tpu.memory_space<vmem>>, %arg5: memref<1x1x128xf32, #tpu.memory_space<vmem>>, %arg6: memref<128x384xbf16, #tpu.memory_space<vmem>>, %arg7: memref<1x384xf32, #tpu.memory_space<vmem>>, %arg8: memref<1x256xf32, #tpu.memory_space<vmem>>, %arg9: memref<256x4xf32, #tpu.memory_space<vmem>>, %arg10: memref<4x256xf32, #tpu.memory_space<vmem>>, %arg11: memref<1x2x8x64xbf16, #tpu.memory_space<vmem>>, %arg12: memref<1x2x8x64xbf16, #tpu.memory_space<vmem>>, %arg13: memref<1x2x8x64xbf16, #tpu.memory_space<vmem>>) attributes {dimension_semantics = [#tpu.dimension_semantics<parallel>, #tpu.dimension_semantics<parallel>], iteration_bounds = array<i64: 2, 4>, scalar_prefetch = 0 : i64, scratch_operands = 0 : i64, tpu.core_type = #tpu.core_type<tc>, window_params = [{transform_indices = @transform_0, window_bounds = array<i64: 1, 8, 128>}, {transform_indices = @transform_1, window_bounds = array<i64: 1, 8, 128>}, {pipeline_mode = #tpu.pipeline_mode<synchronous>, transform_indices = @transform_2, window_bounds = array<i64: 1, 1, 128>}, {pipeline_mode = #tpu.pipeline_mode<synchronous>, transform_indices = @transform_3, window_bounds = array<i64: 1, 1, 128>}, {pipeline_mode = #tpu.pipeline_mode<synchronous>, transform_indices = @transform_4, window_bounds = array<i64: 128, 384>}, {pipeline_mode = #tpu.pipeline_mode<synchronous>, transform_indices = @transform_5, window_bounds = array<i64: 1, 384>}, {pipeline_mode = #tpu.pipeline_mode<synchronous>, transform_indices = @transform_6, window_bounds = array<i64: 1, 256>}, {pipeline_mode = #tpu.pipeline_mode<synchronous>, transform_indices = @transform_7, window_bounds = array<i64: 256, 4>}, {pipeline_mode = #tpu.pipeline_mode<synchronous>, transform_indices = @transform_8, window_bounds = array<i64: 4, 256>}, {transform_indices = @transform_9, window_bounds = array<i64: 1, 2, 8, 64>}, {transform_indices = @transform_10, window_bounds = array<i64: 1, 2, 8, 64>}, {transform_indices = @transform_11, window_bounds = array<i64: 1, 2, 8, 64>}]} {
    %c0 = arith.constant 0 : index
    %c0_0 = arith.constant 0 : index
    %c0_1 = arith.constant 0 : index
    %0 = vector.load %arg2[%c0, %c0_0, %c0_1] : memref<1x8x128xbf16, #tpu.memory_space<vmem>>, vector<1x8x128xbf16>
    %1 = vector.shape_cast %0 : vector<1x8x128xbf16> to vector<8x128xbf16>
    %2 = arith.extf %1 : vector<8x128xbf16> to vector<8x128xf32>
    %cst = arith.constant dense<0.000000e+00> : vector<8xf32>
    %3 = vector.multi_reduction <add>, %2, %cst [1] : vector<8x128xf32> to vector<8xf32>
    %4 = vector.shape_cast %3 : vector<8xf32> to vector<8x1xf32>
    %cst_2 = arith.constant 1.280000e+02 : f32
    %5 = vector.broadcast %cst_2 : f32 to vector<8x1xf32>
    %6 = arith.divf %4, %5 : vector<8x1xf32>
    %7 = vector.broadcast %6 : vector<8x1xf32> to vector<8x128xf32>
    %8 = arith.subf %2, %7 : vector<8x128xf32>
    %9 = arith.mulf %8, %8 : vector<8x128xf32>
    %cst_3 = arith.constant dense<0.000000e+00> : vector<8xf32>
    %10 = vector.multi_reduction <add>, %9, %cst_3 [1] : vector<8x128xf32> to vector<8xf32>
    %11 = vector.shape_cast %10 : vector<8xf32> to vector<8x1xf32>
    %cst_4 = arith.constant 1.280000e+02 : f32
    %12 = vector.broadcast %cst_4 : f32 to vector<8x1xf32>
    %13 = arith.divf %11, %12 : vector<8x1xf32>
    %14 = vector.broadcast %6 : vector<8x1xf32> to vector<8x128xf32>
    %15 = arith.subf %2, %14 : vector<8x128xf32>
    %cst_5 = arith.constant 9.99999997E-7 : f32
    %16 = vector.broadcast %cst_5 : f32 to vector<8x1xf32>
    %17 = arith.addf %13, %16 : vector<8x1xf32>
    %18 = math.rsqrt %17 : vector<8x1xf32>
    %19 = vector.broadcast %18 : vector<8x1xf32> to vector<8x128xf32>
    %20 = arith.mulf %15, %19 : vector<8x128xf32>
    %c0_6 = arith.constant 0 : index
    %c0_7 = arith.constant 0 : index
    %c0_8 = arith.constant 0 : index
    %21 = vector.load %arg5[%c0_6, %c0_7, %c0_8] : memref<1x1x128xf32, #tpu.memory_space<vmem>>, vector<1x1x128xf32>
    %22 = vector.shape_cast %21 : vector<1x1x128xf32> to vector<1x128xf32>
    %cst_9 = arith.constant 1.000000e+00 : f32
    %23 = vector.broadcast %cst_9 : f32 to vector<1x128xf32>
    %24 = arith.addf %23, %22 : vector<1x128xf32>
    %25 = vector.broadcast %24 : vector<1x128xf32> to vector<8x128xf32>
    %26 = arith.mulf %20, %25 : vector<8x128xf32>
    %c0_10 = arith.constant 0 : index
    %c0_11 = arith.constant 0 : index
    %c0_12 = arith.constant 0 : index
    %27 = vector.load %arg4[%c0_10, %c0_11, %c0_12] : memref<1x1x128xf32, #tpu.memory_space<vmem>>, vector<1x1x128xf32>
    %28 = vector.shape_cast %27 : vector<1x1x128xf32> to vector<1x128xf32>
    %29 = vector.broadcast %28 : vector<1x128xf32> to vector<8x128xf32>
    %30 = arith.addf %26, %29 : vector<8x128xf32>
    %31 = arith.truncf %30 : vector<8x128xf32> to vector<8x128xbf16>
    %c0_13 = arith.constant 0 : index
    %c0_14 = arith.constant 0 : index
    %32 = vector.load %arg6[%c0_13, %c0_14] : memref<128x384xbf16, #tpu.memory_space<vmem>>, vector<128x384xbf16>
    %cst_15 = arith.constant dense<0.000000e+00> : vector<8x384xf32>
    %33 = tpu.matmul %31, %32, %cst_15 {dimension_numbers = #tpu.dot_dimension_numbers<[1], [0], [0], [1], [0, 0, 1, 1], [], []>} : vector<8x128xbf16>, vector<128x384xbf16>, vector<8x384xf32> -> vector<8x384xf32>
    %c0_16 = arith.constant 0 : index
    %c0_17 = arith.constant 0 : index
    %34 = vector.load %arg7[%c0_16, %c0_17] : memref<1x384xf32, #tpu.memory_space<vmem>>, vector<1x384xf32>
    %35 = vector.broadcast %34 : vector<1x384xf32> to vector<8x384xf32>
    %36 = arith.addf %33, %35 : vector<8x384xf32>
    %37 = vector.extract_strided_slice %36 {offsets = [0, 0], sizes = [8, 256], strides = [1, 1]} : vector<8x384xf32> to vector<8x256xf32>
    %38 = arith.mulf %37, %37 : vector<8x256xf32>
    %c0_18 = arith.constant 0 : index
    %c0_19 = arith.constant 0 : index
    %39 = vector.load %arg9[%c0_18, %c0_19] : memref<256x4xf32, #tpu.memory_space<vmem>>, vector<256x4xf32>
    %cst_20 = arith.constant dense<0.000000e+00> : vector<8x4xf32>
    %40 = tpu.matmul %38, %39, %cst_20 {dimension_numbers = #tpu.dot_dimension_numbers<[1], [0], [0], [1], [0, 0, 1, 1], [], []>} : vector<8x256xf32>, vector<256x4xf32>, vector<8x4xf32> -> vector<8x4xf32>
    %cst_21 = arith.constant 9.99999997E-7 : f32
    %41 = vector.broadcast %cst_21 : f32 to vector<8x4xf32>
    %42 = arith.addf %40, %41 : vector<8x4xf32>
    %43 = math.rsqrt %42 : vector<8x4xf32>
    %c0_22 = arith.constant 0 : index
    %c0_23 = arith.constant 0 : index
    %44 = vector.load %arg10[%c0_22, %c0_23] : memref<4x256xf32, #tpu.memory_space<vmem>>, vector<4x256xf32>
    %cst_24 = arith.constant dense<0.000000e+00> : vector<8x256xf32>
    %45 = tpu.matmul %43, %44, %cst_24 {dimension_numbers = #tpu.dot_dimension_numbers<[1], [0], [0], [1], [0, 0, 1, 1], [], []>} : vector<8x4xf32>, vector<4x256xf32>, vector<8x256xf32> -> vector<8x256xf32>
    %46 = arith.mulf %37, %45 : vector<8x256xf32>
    %c0_25 = arith.constant 0 : index
    %c0_26 = arith.constant 0 : index
    %47 = vector.load %arg8[%c0_25, %c0_26] : memref<1x256xf32, #tpu.memory_space<vmem>>, vector<1x256xf32>
    %48 = vector.broadcast %47 : vector<1x256xf32> to vector<8x256xf32>
    %49 = arith.mulf %46, %48 : vector<8x256xf32>
    %c0_27 = arith.constant 0 : index
    %c0_28 = arith.constant 0 : index
    %c0_29 = arith.constant 0 : index
    %50 = vector.load %arg3[%c0_27, %c0_28, %c0_29] : memref<1x8x128xf32, #tpu.memory_space<vmem>>, vector<1x8x128xf32>
    %51 = vector.shape_cast %50 : vector<1x8x128xf32> to vector<8x128xf32>
    %52 = vector.extract_strided_slice %51 {offsets = [0, 0], sizes = [8, 64], strides = [1, 1]} : vector<8x128xf32> to vector<8x64xf32>
    %c0_30 = arith.constant 0 : index
    %c0_31 = arith.constant 0 : index
    %c0_32 = arith.constant 0 : index
    %53 = vector.load %arg3[%c0_30, %c0_31, %c0_32] : memref<1x8x128xf32, #tpu.memory_space<vmem>>, vector<1x8x128xf32>
    %54 = vector.shape_cast %53 : vector<1x8x128xf32> to vector<8x128xf32>
    %55 = vector.extract_strided_slice %54 {offsets = [0, 64], sizes = [8, 64], strides = [1, 1]} : vector<8x128xf32> to vector<8x64xf32>
    %56 = tpu.concatenate %52, %52, %52, %52 in 1 : vector<8x64xf32>, vector<8x64xf32>, vector<8x64xf32>, vector<8x64xf32> -> vector<8x256xf32>
    %57 = tpu.concatenate %55, %55, %55, %55 in 1 : vector<8x64xf32>, vector<8x64xf32>, vector<8x64xf32>, vector<8x64xf32> -> vector<8x256xf32>
    %58 = vector.extract_strided_slice %49 {offsets = [0, 32], sizes = [8, 224], strides = [1, 1]} : vector<8x256xf32> to vector<8x224xf32>
    %59 = vector.extract_strided_slice %49 {offsets = [0, 0], sizes = [8, 32], strides = [1, 1]} : vector<8x256xf32> to vector<8x32xf32>
    %60 = tpu.concatenate %58, %59 in 1 : vector<8x224xf32>, vector<8x32xf32> -> vector<8x256xf32>
    %61 = vector.extract_strided_slice %49 {offsets = [0, 224], sizes = [8, 32], strides = [1, 1]} : vector<8x256xf32> to vector<8x32xf32>
    %62 = vector.extract_strided_slice %49 {offsets = [0, 0], sizes = [8, 224], strides = [1, 1]} : vector<8x256xf32> to vector<8x224xf32>
    %63 = tpu.concatenate %61, %62 in 1 : vector<8x32xf32>, vector<8x224xf32> -> vector<8x256xf32>
    %64 = tpu.iota {dimensions = array<i32: 1>} : vector<1x256xi32>
    %c64_i32 = arith.constant 64 : i32
    %c0_i32 = arith.constant 0 : i32
    %65 = arith.cmpi eq, %c64_i32, %c0_i32 : i32
    %c1_i32 = arith.constant 1 : i32
    %66 = arith.select %65, %c1_i32, %c64_i32 : i32
    %67 = vector.broadcast %66 : i32 to vector<1x256xi32>
    %68 = arith.remsi %64, %67 : vector<1x256xi32>
    %c0_i32_33 = arith.constant 0 : i32
    %69 = vector.broadcast %c0_i32_33 : i32 to vector<1x256xi32>
    %70 = arith.cmpi ne, %68, %69 : vector<1x256xi32>
    %c0_i32_34 = arith.constant 0 : i32
    %71 = vector.broadcast %c0_i32_34 : i32 to vector<1x256xi32>
    %72 = arith.cmpi slt, %68, %71 : vector<1x256xi32>
    %c0_i32_35 = arith.constant 0 : i32
    %73 = arith.cmpi slt, %66, %c0_i32_35 : i32
    %74 = vector.broadcast %73 : i1 to vector<1x256xi1>
    %75 = vector.broadcast %74 : vector<1x256xi1> to vector<1x256xi1>
    %76 = arith.xori %72, %75 : vector<1x256xi1>
    %77 = arith.andi %76, %70 : vector<1x256xi1>
    %78 = vector.broadcast %66 : i32 to vector<1x256xi32>
    %79 = arith.addi %68, %78 : vector<1x256xi32>
    %80 = arith.select %77, %79, %68 : vector<1x256xi1>, vector<1x256xi32>
    %c32_i32 = arith.constant 32 : i32
    %81 = vector.broadcast %c32_i32 : i32 to vector<1x256xi32>
    %82 = arith.cmpi slt, %80, %81 : vector<1x256xi32>
    %83 = vector.shape_cast %82 : vector<1x256xi1> to vector<1x256xi1>
    %84 = vector.broadcast %83 : vector<1x256xi1> to vector<8x256xi1>
    %85 = arith.select %84, %60, %63 : vector<8x256xi1>, vector<8x256xf32>
    %86 = arith.mulf %49, %56 : vector<8x256xf32>
    %87 = arith.mulf %85, %57 : vector<8x256xf32>
    %88 = arith.addf %86, %87 : vector<8x256xf32>
    %89 = arith.truncf %88 : vector<8x256xf32> to vector<8x256xbf16>
    %90 = vector.extract_strided_slice %36 {offsets = [0, 256], sizes = [8, 128], strides = [1, 1]} : vector<8x384xf32> to vector<8x128xf32>
    %91 = arith.truncf %90 : vector<8x128xf32> to vector<8x128xbf16>
    %92 = vector.extract_strided_slice %89 {offsets = [0, 0], sizes = [8, 64], strides = [1, 1]} : vector<8x256xbf16> to vector<8x64xbf16>
    %c0_36 = arith.constant 0 : index
    %c0_37 = arith.constant 0 : index
    %c0_38 = arith.constant 0 : index
    %c0_39 = arith.constant 0 : index
    %93 = vector.load %arg11[%c0_36, %c0_37, %c0_38, %c0_39] : memref<1x2x8x64xbf16, #tpu.memory_space<vmem>>, vector<1x1x8x64xbf16>
    %94 = vector.shape_cast %93 : vector<1x1x8x64xbf16> to vector<8x64xbf16>
    %95 = vector.shape_cast %92 : vector<8x64xbf16> to vector<1x1x8x64xbf16>
    tpu.vector_store %arg11[%c0_36, %c0_37, %c0_38, %c0_39], %95 {strides = array<i32>} : memref<1x2x8x64xbf16, #tpu.memory_space<vmem>>, vector<1x1x8x64xbf16>,
    %96 = vector.extract_strided_slice %89 {offsets = [0, 128], sizes = [8, 64], strides = [1, 1]} : vector<8x256xbf16> to vector<8x64xbf16>
    %c0_40 = arith.constant 0 : index
    %c0_41 = arith.constant 0 : index
    %c0_42 = arith.constant 0 : index
    %c0_43 = arith.constant 0 : index
    %97 = vector.load %arg12[%c0_40, %c0_41, %c0_42, %c0_43] : memref<1x2x8x64xbf16, #tpu.memory_space<vmem>>, vector<1x1x8x64xbf16>
    %98 = vector.shape_cast %97 : vector<1x1x8x64xbf16> to vector<8x64xbf16>
    %99 = vector.shape_cast %96 : vector<8x64xbf16> to vector<1x1x8x64xbf16>
    tpu.vector_store %arg12[%c0_40, %c0_41, %c0_42, %c0_43], %99 {strides = array<i32>} : memref<1x2x8x64xbf16, #tpu.memory_space<vmem>>, vector<1x1x8x64xbf16>,
    %100 = vector.extract_strided_slice %91 {offsets = [0, 0], sizes = [8, 64], strides = [1, 1]} : vector<8x128xbf16> to vector<8x64xbf16>
    %c0_44 = arith.constant 0 : index
    %c0_45 = arith.constant 0 : index
    %c0_46 = arith.constant 0 : index
    %c0_47 = arith.constant 0 : index
    %101 = vector.load %arg13[%c0_44, %c0_45, %c0_46, %c0_47] : memref<1x2x8x64xbf16, #tpu.memory_space<vmem>>, vector<1x1x8x64xbf16>
    %102 = vector.shape_cast %101 : vector<1x1x8x64xbf16> to vector<8x64xbf16>
    %103 = vector.shape_cast %100 : vector<8x64xbf16> to vector<1x1x8x64xbf16>
    tpu.vector_store %arg13[%c0_44, %c0_45, %c0_46, %c0_47], %103 {strides = array<i32>} : memref<1x2x8x64xbf16, #tpu.memory_space<vmem>>, vector<1x1x8x64xbf16>,
    %104 = vector.extract_strided_slice %89 {offsets = [0, 64], sizes = [8, 64], strides = [1, 1]} : vector<8x256xbf16> to vector<8x64xbf16>
    %c0_48 = arith.constant 0 : index
    %c1 = arith.constant 1 : index
    %c0_49 = arith.constant 0 : index
    %c0_50 = arith.constant 0 : index
    %105 = vector.load %arg11[%c0_48, %c1, %c0_49, %c0_50] : memref<1x2x8x64xbf16, #tpu.memory_space<vmem>>, vector<1x1x8x64xbf16>
    %106 = vector.shape_cast %105 : vector<1x1x8x64xbf16> to vector<8x64xbf16>
    %107 = vector.shape_cast %104 : vector<8x64xbf16> to vector<1x1x8x64xbf16>
    tpu.vector_store %arg11[%c0_48, %c1, %c0_49, %c0_50], %107 {strides = array<i32>} : memref<1x2x8x64xbf16, #tpu.memory_space<vmem>>, vector<1x1x8x64xbf16>,
    %108 = vector.extract_strided_slice %89 {offsets = [0, 192], sizes = [8, 64], strides = [1, 1]} : vector<8x256xbf16> to vector<8x64xbf16>
    %c0_51 = arith.constant 0 : index
    %c1_52 = arith.constant 1 : index
    %c0_53 = arith.constant 0 : index
    %c0_54 = arith.constant 0 : index
    %109 = vector.load %arg12[%c0_51, %c1_52, %c0_53, %c0_54] : memref<1x2x8x64xbf16, #tpu.memory_space<vmem>>, vector<1x1x8x64xbf16>
    %110 = vector.shape_cast %109 : vector<1x1x8x64xbf16> to vector<8x64xbf16>
    %111 = vector.shape_cast %108 : vector<8x64xbf16> to vector<1x1x8x64xbf16>
    tpu.vector_store %arg12[%c0_51, %c1_52, %c0_53, %c0_54], %111 {strides = array<i32>} : memref<1x2x8x64xbf16, #tpu.memory_space<vmem>>, vector<1x1x8x64xbf16>,
    %112 = vector.extract_strided_slice %91 {offsets = [0, 64], sizes = [8, 64], strides = [1, 1]} : vector<8x128xbf16> to vector<8x64xbf16>
    %c0_55 = arith.constant 0 : index
    %c1_56 = arith.constant 1 : index
    %c0_57 = arith.constant 0 : index
    %c0_58 = arith.constant 0 : index
    %113 = vector.load %arg13[%c0_55, %c1_56, %c0_57, %c0_58] : memref<1x2x8x64xbf16, #tpu.memory_space<vmem>>, vector<1x1x8x64xbf16>
    %114 = vector.shape_cast %113 : vector<1x1x8x64xbf16> to vector<8x64xbf16>
    %115 = vector.shape_cast %112 : vector<8x64xbf16> to vector<1x1x8x64xbf16>
    tpu.vector_store %arg13[%c0_55, %c1_56, %c0_57, %c0_58], %115 {strides = array<i32>} : memref<1x2x8x64xbf16, #tpu.memory_space<vmem>>, vector<1x1x8x64xbf16>,
    return
  }
  func.func @transform_0(%arg0: i32, %arg1: i32) -> (i32, i32, i32) {
    %c0_i32 = arith.constant 0 : i32
    %c0_i32_0 = arith.constant 0 : i32
    return %arg0, %arg1, %c0_i32 : i32, i32, i32
  }
  func.func @transform_1(%arg0: i32, %arg1: i32) -> (i32, i32, i32) {
    %c0_i32 = arith.constant 0 : i32
    %c0_i32_0 = arith.constant 0 : i32
    %c0_i32_1 = arith.constant 0 : i32
    return %c0_i32, %arg1, %c0_i32_0 : i32, i32, i32
  }
  func.func @transform_2(%arg0: i32, %arg1: i32) -> (i32, i32, i32) {
    %c0_i32 = arith.constant 0 : i32
    %c0_i32_0 = arith.constant 0 : i32
    %c0_i32_1 = arith.constant 0 : i32
    return %arg0, %c0_i32, %c0_i32_0 : i32, i32, i32
  }
  func.func @transform_3(%arg0: i32, %arg1: i32) -> (i32, i32, i32) {
    %c0_i32 = arith.constant 0 : i32
    %c0_i32_0 = arith.constant 0 : i32
    %c0_i32_1 = arith.constant 0 : i32
    return %arg0, %c0_i32, %c0_i32_0 : i32, i32, i32
  }
  func.func @transform_4(%arg0: i32, %arg1: i32) -> (i32, i32) {
    %c0_i32 = arith.constant 0 : i32
    %c0_i32_0 = arith.constant 0 : i32
    %c0_i32_1 = arith.constant 0 : i32
    return %c0_i32, %c0_i32_0 : i32, i32
  }
  func.func @transform_5(%arg0: i32, %arg1: i32) -> (i32, i32) {
    %c0_i32 = arith.constant 0 : i32
    %c0_i32_0 = arith.constant 0 : i32
    %c0_i32_1 = arith.constant 0 : i32
    return %c0_i32, %c0_i32_0 : i32, i32
  }
  func.func @transform_6(%arg0: i32, %arg1: i32) -> (i32, i32) {
    %c0_i32 = arith.constant 0 : i32
    %c0_i32_0 = arith.constant 0 : i32
    %c0_i32_1 = arith.constant 0 : i32
    return %c0_i32, %c0_i32_0 : i32, i32
  }
  func.func @transform_7(%arg0: i32, %arg1: i32) -> (i32, i32) {
    %c0_i32 = arith.constant 0 : i32
    %c0_i32_0 = arith.constant 0 : i32
    %c0_i32_1 = arith.constant 0 : i32
    return %c0_i32, %c0_i32_0 : i32, i32
  }
  func.func @transform_8(%arg0: i32, %arg1: i32) -> (i32, i32) {
    %c0_i32 = arith.constant 0 : i32
    %c0_i32_0 = arith.constant 0 : i32
    %c0_i32_1 = arith.constant 0 : i32
    return %c0_i32, %c0_i32_0 : i32, i32
  }
  func.func @transform_9(%arg0: i32, %arg1: i32) -> (i32, i32, i32, i32) {
    %c0_i32 = arith.constant 0 : i32
    %c0_i32_0 = arith.constant 0 : i32
    %c0_i32_1 = arith.constant 0 : i32
    return %arg0, %c0_i32, %arg1, %c0_i32_0 : i32, i32, i32, i32
  }
  func.func @transform_10(%arg0: i32, %arg1: i32) -> (i32, i32, i32, i32) {
    %c0_i32 = arith.constant 0 : i32
    %c0_i32_0 = arith.constant 0 : i32
    %c0_i32_1 = arith.constant 0 : i32
    return %arg0, %c0_i32, %arg1, %c0_i32_0 : i32, i32, i32, i32
  }
  func.func @transform_11(%arg0: i32, %arg1: i32) -> (i32, i32, i32, i32) {
    %c0_i32 = arith.constant 0 : i32
    %c0_i32_0 = arith.constant 0 : i32
    %c0_i32_1 = arith.constant 0 : i32
    return %arg0, %c0_i32, %arg1, %c0_i32_0 : i32, i32, i32, i32
  }
}

</mosaic_0001>

<llo_original>
// kernel: tpu_custom_call.1
$region0: #{tpu_custom_call.1}
  #allocation0 [shape = 'u32[]', space=smem, size = 0x4, offset = 0x4, fixed_abs, tag = 'smem constant byte address 0x4 - core index']
  #allocation1 [shape = 'u32[144,128]{1,0:T(1,128)}', space=vmem, size = 0x12000, scoped, tag = 'internal scratch']
  %s0 = inlined_call_operand.vmem [shape: bf16[2,32,128], index: 0, kind: input, shape index: {}]
  %s1 = inlined_call_operand.vmem [shape: f32[1,32,128], index: 1, kind: input, shape index: {}]
  %s2 = inlined_call_operand.hbm [shape: f32[2,1,128], index: 2, kind: input, shape index: {}]
  %s3 = inlined_call_operand.hbm [shape: f32[2,1,128], index: 3, kind: input, shape index: {}]
  %s4 = inlined_call_operand.vmem [shape: bf16[128,384], index: 4, kind: input, shape index: {}]
  %s5 = inlined_call_operand.vmem [shape: f32[1,384], index: 5, kind: input, shape index: {}]
  %s6 = inlined_call_operand.hbm [shape: f32[1,256], index: 6, kind: input, shape index: {}]
  %s7 = inlined_call_operand.vmem [shape: f32[256,4], index: 7, kind: input, shape index: {}]
  %s8 = inlined_call_operand.vmem [shape: f32[4,256], index: 8, kind: input, shape index: {}]
  %s9 = inlined_call_operand.hbm [shape: bf16[2,2,32,64], index: 9, kind: output, shape index: {0}]
  %s10 = inlined_call_operand.hbm [shape: bf16[2,2,32,64], index: 10, kind: output, shape index: {1}]
  %s11 = inlined_call_operand.hbm [shape: bf16[2,2,32,64], index: 11, kind: output, shape index: {2}]
  %12 = xla_tuple %s9, %s10, %s11
  %s13 = sld [smem:[#allocation0]]
  $region97: #{tpu_custom_call.1} parent=0
    _
  %s15 = ssub.s32 1, %s13
  %s16 = scalar_select 0, %s15, %s13
  $region1: #{tpu_custom_call.1} parent=0
    #allocation2 [shape = 'u8[512]{0}', space=vmem, size = 0x400, scoped, tag = 'input window, operand 2, single buffered']
    #allocation3 [shape = 's32[2]{0}', space=sflag, size = 0x8, scoped, tag = 'scoped memory for tpu_custom_call.1']
    #allocation4 [shape = 's32[2]{0}', space=sflag, size = 0x8, scoped, tag = 'scoped memory for tpu_custom_call.1']
    #allocation5 [shape = 'u8[512]{0}', space=vmem, size = 0x400, scoped, tag = 'input window, operand 3, single buffered']
    #allocation6 [shape = 's32[1]{0}', space=sflag, size = 0x4, scoped, tag = 'scoped memory for tpu_custom_call.1']
    #allocation7 [shape = 'u8[1024]{0}', space=vmem, size = 0x400, scoped, tag = 'input window, operand 6, single buffered']
    #allocation8 [shape = 'u8[8192]{0}', space=vmem, size = 0x2000, scoped, tag = 'output window, operand 0']
    #allocation9 [shape = 'u8[8192]{0}', space=vmem, size = 0x2000, scoped, tag = 'output window, operand 1']
    #allocation10 [shape = 's32[2]{0}', space=sflag, size = 0x8, scoped, tag = 'scoped memory for tpu_custom_call.1']
    #allocation11 [shape = 'u8[8192]{0}', space=vmem, size = 0x2000, scoped, tag = 'output window, operand 2']
    %17 = vsyncpa [#allocation3], 0
    %18 = vsyncpa [#allocation6], 0
    %19 = vsyncpa [#allocation4], 0
    %s20 = scalar_lea.sflag [#allocation4], 1
    %21 = vsyncpa %s20, 0
    %22 = vsyncpa [#allocation10], 0
    %s23 = scalar_lea.sflag [#allocation10], 1
    %24 = vsyncpa %s23, 0
    loop: start=0, step=1, limit=10
    $region2: #{tpu_custom_call.1} parent=1 // loop_pre_header
      _
    $region3: #{tpu_custom_call.1} parent=1 // loop_header
      %s26 = sphi 0, %s30
      %p27 = scmp.ge.s32.totalorder %s26, 10
      %s33 = sphi 0, %s45
      %s34 = sphi 0, %s41
      %s35 = sphi 0, %s33
      %s36 = sphi 0, %s34
      %s37 = sphi 0, %s35
      %s38 = sphi 0, %s36
      %s50 = sphi 0, %s52
      %s53 = sphi 0, %s50
      %s54 = sphi 0, %s53
      %s70 = sphi 0, %s54
      %s76 = sphi 0, %s78
      %s79 = sphi 0, %s76
      %s80 = sphi 0, %s79
      %s96 = sphi 0, %s80
      %s102 = sphi 0, %s104
      %s105 = sphi 0, %s102
      %s106 = sphi 0, %s105
      %s122 = sphi 0, %s106
      %s128 = sphi 0, %s130
      %s131 = sphi 0, %s128
      %s132 = sphi 0, %s131
      %s148 = sphi 0, %s132
      %s152 = sphi 0, %s152
      %s154 = sphi 0, %s152
      %s155 = sphi 0, %s154
      %s169 = sphi 0, %s155
      %s173 = sphi 0, %s173
      %s175 = sphi 0, %s173
      %s176 = sphi 0, %s175
      %s190 = sphi 0, %s176
      %s194 = sphi 0, %s194
      %s196 = sphi 0, %s194
      %s197 = sphi 0, %s196
      %s211 = sphi 0, %s197
      %s215 = sphi 0, %s215
      %s217 = sphi 0, %s215
      %s218 = sphi 0, %s217
      %s232 = sphi 0, %s218
      %s236 = sphi 0, %s236
      %s238 = sphi 0, %s236
      %s239 = sphi 0, %s238
      %s253 = sphi 0, %s239
      %s261 = sphi 0, %s263
      %s264 = sphi 0, %s261
      %s265 = sphi 0, %s264
      %s281 = sphi 0, %s265
      %s289 = sphi 0, %s291
      %s292 = sphi 0, %s289
      %s293 = sphi 0, %s292
      %s309 = sphi 0, %s293
      %s317 = sphi 0, %s319
      %s320 = sphi 0, %s317
      %s321 = sphi 0, %s320
      %s337 = sphi 0, %s321
    $region4: #{tpu_custom_call.1} parent=1 // loop_header_branch
      %29 = sbr.rel (%p27) target = $region8
    $region5: #{tpu_custom_call.1} parent=1 // loop_body
      %s31 = ssub.s32 %s26, 1
      %s32 = ssub.s32 %s26, 2
      %s39 = sadd.s32 1, %s34
      %p40 = scmp.ge.s32.totalorder %s39, 4
      %s41 = scalar_select %p40, 0, %s39
      %s42 = sadd.s32 1, %s33
      %s43 = scalar_select %p40, %s42, %s33
      %p44 = scmp.ge.s32.totalorder %s43, 2
      %s45 = scalar_select %p44, 0, %s43
      %s46 = ssub.s32 %s33, %s45
      %s47 = ssub.s32 %s34, %s41
      %s48 = sor.u32 %s46, %s47
      %p49 = scmp.eq.s32.totalorder %s48, 0
      %s51 = sadd.s32 %s50, 1
      %s52 = scalar_select %p49, %s50, %s51
      %p55 = pneg %p49
      %p56 = scmp.eq.s32.totalorder %s26, 7
      %p57 = por %p55, %p56
      %p58 = scmp.ne.s32.totalorder %s50, %s53
      %p59 = scmp.eq.s32.totalorder %s26, 0
      %p60 = por %p58, %p59
      %p61 = scmp.ne.s32.totalorder %s50, %s53
      %p62 = scmp.eq.s32.totalorder %s31, 7
      %p63 = por %p61, %p62
      %p64 = scmp.ne.s32.totalorder %s53, %s54
      %p65 = scmp.eq.s32.totalorder %s31, 0
      %p66 = por %p64, %p65
      %p67 = scmp.ne.s32.totalorder %s53, %s54
      %p68 = scmp.eq.s32.totalorder %s32, 7
      %p69 = por %p67, %p68
      %p71 = scmp.ne.s32.totalorder %s54, %s70
      %p72 = scmp.eq.s32.totalorder %s32, 0
      %p73 = por %p71, %p72
      %s74 = ssub.s32 %s34, %s41
      %p75 = scmp.eq.s32.totalorder %s74, 0
      %s77 = sadd.s32 %s76, 1
      %s78 = scalar_select %p75, %s76, %s77
      %p81 = pneg %p75
      %p82 = scmp.eq.s32.totalorder %s26, 7
      %p83 = por %p81, %p82
      %p84 = scmp.ne.s32.totalorder %s76, %s79
      %p85 = scmp.eq.s32.totalorder %s26, 0
      %p86 = por %p84, %p85
      %p87 = scmp.ne.s32.totalorder %s76, %s79
      %p88 = scmp.eq.s32.totalorder %s31, 7
      %p89 = por %p87, %p88
      %p90 = scmp.ne.s32.totalorder %s79, %s80
      %p91 = scmp.eq.s32.totalorder %s31, 0
      %p92 = por %p90, %p91
      %p93 = scmp.ne.s32.totalorder %s79, %s80
      %p94 = scmp.eq.s32.totalorder %s32, 7
      %p95 = por %p93, %p94
      %p97 = scmp.ne.s32.totalorder %s80, %s96
      %p98 = scmp.eq.s32.totalorder %s32, 0
      %p99 = por %p97, %p98
      %s100 = ssub.s32 %s33, %s45
      %p101 = scmp.eq.s32.totalorder %s100, 0
      %s103 = sadd.s32 %s102, 1
      %s104 = scalar_select %p101, %s102, %s103
      %p107 = pneg %p101
      %p108 = scmp.eq.s32.totalorder %s26, 7
      %p109 = por %p107, %p108
      %p110 = scmp.ne.s32.totalorder %s102, %s105
      %p111 = scmp.eq.s32.totalorder %s26, 0
      %p112 = por %p110, %p111
      %p113 = scmp.ne.s32.totalorder %s102, %s105
      %p114 = scmp.eq.s32.totalorder %s31, 7
      %p115 = por %p113, %p114
      %p116 = scmp.ne.s32.totalorder %s105, %s106
      %p117 = scmp.eq.s32.totalorder %s31, 0
      %p118 = por %p116, %p117
      %p119 = scmp.ne.s32.totalorder %s105, %s106
      %p120 = scmp.eq.s32.totalorder %s32, 7
      %p121 = por %p119, %p120
      %p123 = scmp.ne.s32.totalorder %s106, %s122
      %p124 = scmp.eq.s32.totalorder %s32, 0
      %p125 = por %p123, %p124
      %s126 = ssub.s32 %s33, %s45
      %p127 = scmp.eq.s32.totalorder %s126, 0
      %s129 = sadd.s32 %s128, 1
      %s130 = scalar_select %p127, %s128, %s129
      %p133 = pneg %p127
      %p134 = scmp.eq.s32.totalorder %s26, 7
      %p135 = por %p133, %p134
      %p136 = scmp.ne.s32.totalorder %s128, %s131
      %p137 = scmp.eq.s32.totalorder %s26, 0
      %p138 = por %p136, %p137
      %p139 = scmp.ne.s32.totalorder %s128, %s131
      %p140 = scmp.eq.s32.totalorder %s31, 7
      %p141 = por %p139, %p140
      %p142 = scmp.ne.s32.totalorder %s131, %s132
      %p143 = scmp.eq.s32.totalorder %s31, 0
      %p144 = por %p142, %p143
      %p145 = scmp.ne.s32.totalorder %s131, %s132
      %p146 = scmp.eq.s32.totalorder %s32, 7
      %p147 = por %p145, %p146
      %p149 = scmp.ne.s32.totalorder %s132, %s148
      %p150 = scmp.eq.s32.totalorder %s32, 0
      %p151 = por %p149, %p150
      %s153 = sadd.s32 %s152, 1
      %p156 = scmp.eq.s32.totalorder %s26, 7
      %p157 = scmp.ne.s32.totalorder %s152, %s154
      %p158 = scmp.eq.s32.totalorder %s26, 0
      %p159 = por %p157, %p158
      %p160 = scmp.ne.s32.totalorder %s152, %s154
      %p161 = scmp.eq.s32.totalorder %s31, 7
      %p162 = por %p160, %p161
      %p163 = scmp.ne.s32.totalorder %s154, %s155
      %p164 = scmp.eq.s32.totalorder %s31, 0
      %p165 = por %p163, %p164
      %p166 = scmp.ne.s32.totalorder %s154, %s155
      %p167 = scmp.eq.s32.totalorder %s32, 7
      %p168 = por %p166, %p167
      %p170 = scmp.ne.s32.totalorder %s155, %s169
      %p171 = scmp.eq.s32.totalorder %s32, 0
      %p172 = por %p170, %p171
      %s174 = sadd.s32 %s173, 1
      %p177 = scmp.eq.s32.totalorder %s26, 7
      %p178 = scmp.ne.s32.totalorder %s173, %s175
      %p179 = scmp.eq.s32.totalorder %s26, 0
      %p180 = por %p178, %p179
      %p181 = scmp.ne.s32.totalorder %s173, %s175
      %p182 = scmp.eq.s32.totalorder %s31, 7
      %p183 = por %p181, %p182
      %p184 = scmp.ne.s32.totalorder %s175, %s176
      %p185 = scmp.eq.s32.totalorder %s31, 0
      %p186 = por %p184, %p185
      %p187 = scmp.ne.s32.totalorder %s175, %s176
      %p188 = scmp.eq.s32.totalorder %s32, 7
      %p189 = por %p187, %p188
      %p191 = scmp.ne.s32.totalorder %s176, %s190
      %p192 = scmp.eq.s32.totalorder %s32, 0
      %p193 = por %p191, %p192
      %s195 = sadd.s32 %s194, 1
      %p198 = scmp.eq.s32.totalorder %s26, 7
      %p199 = scmp.ne.s32.totalorder %s194, %s196
      %p200 = scmp.eq.s32.totalorder %s26, 0
      %p201 = por %p199, %p200
      %p202 = scmp.ne.s32.totalorder %s194, %s196
      %p203 = scmp.eq.s32.totalorder %s31, 7
      %p204 = por %p202, %p203
      %p205 = scmp.ne.s32.totalorder %s196, %s197
      %p206 = scmp.eq.s32.totalorder %s31, 0
      %p207 = por %p205, %p206
      %p208 = scmp.ne.s32.totalorder %s196, %s197
      %p209 = scmp.eq.s32.totalorder %s32, 7
      %p210 = por %p208, %p209
      %p212 = scmp.ne.s32.totalorder %s197, %s211
      %p213 = scmp.eq.s32.totalorder %s32, 0
      %p214 = por %p212, %p213
      %s216 = sadd.s32 %s215, 1
      %p219 = scmp.eq.s32.totalorder %s26, 7
      %p220 = scmp.ne.s32.totalorder %s215, %s217
      %p221 = scmp.eq.s32.totalorder %s26, 0
      %p222 = por %p220, %p221
      %p223 = scmp.ne.s32.totalorder %s215, %s217
      %p224 = scmp.eq.s32.totalorder %s31, 7
      %p225 = por %p223, %p224
      %p226 = scmp.ne.s32.totalorder %s217, %s218
      %p227 = scmp.eq.s32.totalorder %s31, 0
      %p228 = por %p226, %p227
      %p229 = scmp.ne.s32.totalorder %s217, %s218
      %p230 = scmp.eq.s32.totalorder %s32, 7
      %p231 = por %p229, %p230
      %p233 = scmp.ne.s32.totalorder %s218, %s232
      %p234 = scmp.eq.s32.totalorder %s32, 0
      %p235 = por %p233, %p234
      %s237 = sadd.s32 %s236, 1
      %p240 = scmp.eq.s32.totalorder %s26, 7
      %p241 = scmp.ne.s32.totalorder %s236, %s238
      %p242 = scmp.eq.s32.totalorder %s26, 0
      %p243 = por %p241, %p242
      %p244 = scmp.ne.s32.totalorder %s236, %s238
      %p245 = scmp.eq.s32.totalorder %s31, 7
      %p246 = por %p244, %p245
      %p247 = scmp.ne.s32.totalorder %s238, %s239
      %p248 = scmp.eq.s32.totalorder %s31, 0
      %p249 = por %p247, %p248
      %p250 = scmp.ne.s32.totalorder %s238, %s239
      %p251 = scmp.eq.s32.totalorder %s32, 7
      %p252 = por %p250, %p251
      %p254 = scmp.ne.s32.totalorder %s239, %s253
      %p255 = scmp.eq.s32.totalorder %s32, 0
      %p256 = por %p254, %p255
      %s257 = ssub.s32 %s33, %s45
      %s258 = ssub.s32 %s34, %s41
      %s259 = sor.u32 %s257, %s258
      %p260 = scmp.eq.s32.totalorder %s259, 0
      %s262 = sadd.s32 %s261, 1
      %s263 = scalar_select %p260, %s261, %s262
      %p266 = pneg %p260
      %p267 = scmp.eq.s32.totalorder %s26, 7
      %p268 = por %p266, %p267
      %p269 = scmp.ne.s32.totalorder %s261, %s264
      %p270 = scmp.eq.s32.totalorder %s26, 0
      %p271 = por %p269, %p270
      %p272 = scmp.ne.s32.totalorder %s261, %s264
      %p273 = scmp.eq.s32.totalorder %s31, 7
      %p274 = por %p272, %p273
      %p275 = scmp.ne.s32.totalorder %s264, %s265
      %p276 = scmp.eq.s32.totalorder %s31, 0
      %p277 = por %p275, %p276
      %p278 = scmp.ne.s32.totalorder %s264, %s265
      %p279 = scmp.eq.s32.totalorder %s32, 7
      %p280 = por %p278, %p279
      %p282 = scmp.ne.s32.totalorder %s265, %s281
      %p283 = scmp.eq.s32.totalorder %s32, 0
      %p284 = por %p282, %p283
      %s285 = ssub.s32 %s33, %s45
      %s286 = ssub.s32 %s34, %s41
      %s287 = sor.u32 %s285, %s286
      %p288 = scmp.eq.s32.totalorder %s287, 0
      %s290 = sadd.s32 %s289, 1
      %s291 = scalar_select %p288, %s289, %s290
      %p294 = pneg %p288
      %p295 = scmp.eq.s32.totalorder %s26, 7
      %p296 = por %p294, %p295
      %p297 = scmp.ne.s32.totalorder %s289, %s292
      %p298 = scmp.eq.s32.totalorder %s26, 0
      %p299 = por %p297, %p298
      %p300 = scmp.ne.s32.totalorder %s289, %s292
      %p301 = scmp.eq.s32.totalorder %s31, 7
      %p302 = por %p300, %p301
      %p303 = scmp.ne.s32.totalorder %s292, %s293
      %p304 = scmp.eq.s32.totalorder %s31, 0
      %p305 = por %p303, %p304
      %p306 = scmp.ne.s32.totalorder %s292, %s293
      %p307 = scmp.eq.s32.totalorder %s32, 7
      %p308 = por %p306, %p307
      %p310 = scmp.ne.s32.totalorder %s293, %s309
      %p311 = scmp.eq.s32.totalorder %s32, 0
      %p312 = por %p310, %p311
      %s313 = ssub.s32 %s33, %s45
      %s314 = ssub.s32 %s34, %s41
      %s315 = sor.u32 %s313, %s314
      %p316 = scmp.eq.s32.totalorder %s315, 0
      %s318 = sadd.s32 %s317, 1
      %s319 = scalar_select %p316, %s317, %s318
      %p322 = pneg %p316
      %p323 = scmp.eq.s32.totalorder %s26, 7
      %p324 = por %p322, %p323
      %p325 = scmp.ne.s32.totalorder %s317, %s320
      %p326 = scmp.eq.s32.totalorder %s26, 0
      %p327 = por %p325, %p326
      %p328 = scmp.ne.s32.totalorder %s317, %s320
      %p329 = scmp.eq.s32.totalorder %s31, 7
      %p330 = por %p328, %p329
      %p331 = scmp.ne.s32.totalorder %s320, %s321
      %p332 = scmp.eq.s32.totalorder %s31, 0
      %p333 = por %p331, %p332
      %p334 = scmp.ne.s32.totalorder %s320, %s321
      %p335 = scmp.eq.s32.totalorder %s32, 7
      %p336 = por %p334, %p335
      %p338 = scmp.ne.s32.totalorder %s321, %s337
      %p339 = scmp.eq.s32.totalorder %s32, 0
      %p340 = por %p338, %p339
      %p341 = scmp.le.s32.totalorder 1, %s26
      %p342 = scmp.lt.s32.totalorder %s26, 9
      %p343 = pnand %p341, %p342
      %p344 = pneg %p343
      // Predicated region
      $region9: #{tpu_custom_call.1} parent=5 // pred_check
        _
      $region10: #{tpu_custom_call.1} parent=5 // pred_check_branch
        %346 = sbr.rel (%p343) target = $region12
      $region11: #{tpu_custom_call.1} parent=5 // pred_region
        %s347 = ssub.s32 %s26, 1
        // Predicated region
        $region13: #{tpu_custom_call.1} parent=11 // pred_check
          %p348 = pneg %p118
        $region14: #{tpu_custom_call.1} parent=11 // pred_check_branch
          %350 = sbr.rel (%p348) target = $region16
        $region15: #{tpu_custom_call.1} parent=11 // pred_region
          %s352 = ssub.s32 16, 16
          %353 = vsyncadd [#allocation3], %s352
          %s354 = smul.addr %s35, 16
          %s355 = scalar_lea.hbm %s2, %s354
          %s357 = sshll.u32 [#allocation2], 4
          %s358 = int_to_ptr.vmem [resolvable:$true] %s357
          %360 = dma.hbm_to_vmem [thread:$0]  %s355, 16, %s358, [#allocation3]
        $region16: #{tpu_custom_call.1} parent=11 // pred_fallthru
          _
        // Predicated region
        $region17: #{tpu_custom_call.1} parent=11 // pred_check
          %p361 = pneg %p144
        $region18: #{tpu_custom_call.1} parent=11 // pred_check_branch
          %363 = sbr.rel (%p361) target = $region20
        $region19: #{tpu_custom_call.1} parent=11 // pred_region
          %s365 = ssub.s32 16, 16
          %366 = vsyncadd [#allocation6], %s365
          %s367 = smul.addr %s35, 16
          %s368 = scalar_lea.hbm %s3, %s367
          %s370 = sshll.u32 [#allocation5], 4
          %s371 = int_to_ptr.vmem [resolvable:$true] %s370
          %373 = dma.hbm_to_vmem [thread:$0]  %s368, 16, %s371, [#allocation6]
        $region20: #{tpu_custom_call.1} parent=11 // pred_fallthru
          _
        // Predicated region
        $region21: #{tpu_custom_call.1} parent=11 // pred_check
          %p374 = pneg %p165
        $region22: #{tpu_custom_call.1} parent=11 // pred_check_branch
          %376 = sbr.rel (%p374) target = $region24
        $region23: #{tpu_custom_call.1} parent=11 // pred_region
          _
        $region24: #{tpu_custom_call.1} parent=11 // pred_fallthru
          _
        // Predicated region
        $region25: #{tpu_custom_call.1} parent=11 // pred_check
          %p377 = pneg %p186
        $region26: #{tpu_custom_call.1} parent=11 // pred_check_branch
          %379 = sbr.rel (%p377) target = $region28
        $region27: #{tpu_custom_call.1} parent=11 // pred_region
          _
        $region28: #{tpu_custom_call.1} parent=11 // pred_fallthru
          _
        // Predicated region
        $region29: #{tpu_custom_call.1} parent=11 // pred_check
          %p380 = pneg %p207
        $region30: #{tpu_custom_call.1} parent=11 // pred_check_branch
          %382 = sbr.rel (%p380) target = $region32
        $region31: #{tpu_custom_call.1} parent=11 // pred_region
          %s384 = ssub.s32 32, 32
          %385 = vsyncadd [#allocation6], %s384
          %s387 = sshll.u32 [#allocation7], 4
          %s388 = int_to_ptr.vmem [resolvable:$true] %s387
          %390 = dma.hbm_to_vmem [thread:$0]  %s6, 32, %s388, [#allocation6]
        $region32: #{tpu_custom_call.1} parent=11 // pred_fallthru
          _
        // Predicated region
        $region33: #{tpu_custom_call.1} parent=11 // pred_check
          %p391 = pneg %p228
        $region34: #{tpu_custom_call.1} parent=11 // pred_check_branch
          %393 = sbr.rel (%p391) target = $region36
        $region35: #{tpu_custom_call.1} parent=11 // pred_region
          _
        $region36: #{tpu_custom_call.1} parent=11 // pred_fallthru
          _
        // Predicated region
        $region37: #{tpu_custom_call.1} parent=11 // pred_check
          %p394 = pneg %p249
        $region38: #{tpu_custom_call.1} parent=11 // pred_check_branch
          %396 = sbr.rel (%p394) target = $region40
        $region39: #{tpu_custom_call.1} parent=11 // pred_region
          _
        $region40: #{tpu_custom_call.1} parent=11 // pred_fallthru
          _
      $region12: #{tpu_custom_call.1} parent=5 // pred_fallthru
        _
      %p397 = scmp.lt.s32.totalorder %s26, 8
      // Predicated region
      $region41: #{tpu_custom_call.1} parent=5 // pred_check
        %p398 = pneg %p397
      $region42: #{tpu_custom_call.1} parent=5 // pred_check_branch
        %400 = sbr.rel (%p398) target = $region44
      $region43: #{tpu_custom_call.1} parent=5 // pred_region
        // Predicated region
        $region45: #{tpu_custom_call.1} parent=43 // pred_check
          %p401 = pneg %p60
        $region46: #{tpu_custom_call.1} parent=43 // pred_check_branch
          %403 = sbr.rel (%p401) target = $region48
        $region47: #{tpu_custom_call.1} parent=43 // pred_region
          %p404 = scmp.lt.s32.totalorder %s33, 1
          %s405 = scalar_select %p404, %s33, 1
          %p406 = scmp.lt.s32.totalorder %s34, 3
          %s407 = scalar_select %p406, %s34, 3
          %s408 = smul.addr %s405, 4
          %s409 = sadd.s32 %s407, %s408
          %s410 = smul.addr %s409, 4
          %s411 = scalar_lea.vmem %s0, %s410
        $region48: #{tpu_custom_call.1} parent=43 // pred_fallthru
          _
        // Predicated region
        $region49: #{tpu_custom_call.1} parent=43 // pred_check
          %p412 = pneg %p86
        $region50: #{tpu_custom_call.1} parent=43 // pred_check_branch
          %414 = sbr.rel (%p412) target = $region52
        $region51: #{tpu_custom_call.1} parent=43 // pred_region
          %p415 = scmp.lt.s32.totalorder %s34, 3
          %s416 = scalar_select %p415, %s34, 3
          %s417 = smul.addr %s416, 8
          %s418 = scalar_lea.vmem %s1, %s417
        $region52: #{tpu_custom_call.1} parent=43 // pred_fallthru
          _
      $region44: #{tpu_custom_call.1} parent=5 // pred_fallthru
        _
      %p419 = scmp.le.s32.totalorder 1, %s26
      %p420 = scmp.lt.s32.totalorder %s26, 9
      %p421 = pnand %p419, %p420
      %p422 = pneg %p421
      // Predicated region
      $region53: #{tpu_custom_call.1} parent=5 // pred_check
        _
      $region54: #{tpu_custom_call.1} parent=5 // pred_check_branch
        %424 = sbr.rel (%p421) target = $region56
      $region55: #{tpu_custom_call.1} parent=5 // pred_region
        %s425 = ssub.s32 %s26, 1
        // Predicated region
        $region57: #{tpu_custom_call.1} parent=55 // pred_check
          %p426 = pneg %p118
        $region58: #{tpu_custom_call.1} parent=55 // pred_check_branch
          %428 = sbr.rel (%p426) target = $region60
        $region59: #{tpu_custom_call.1} parent=55 // pred_region
          %429 = dma.done [#allocation3], 16
        $region60: #{tpu_custom_call.1} parent=55 // pred_fallthru
          _
        // Predicated region
        $region61: #{tpu_custom_call.1} parent=55 // pred_check
          %p430 = pneg %p144
        $region62: #{tpu_custom_call.1} parent=55 // pred_check_branch
          %432 = sbr.rel (%p430) target = $region64
        $region63: #{tpu_custom_call.1} parent=55 // pred_region
          %433 = dma.done [#allocation6], 16
        $region64: #{tpu_custom_call.1} parent=55 // pred_fallthru
          _
        // Predicated region
        $region65: #{tpu_custom_call.1} parent=55 // pred_check
          %p434 = pneg %p207
        $region66: #{tpu_custom_call.1} parent=55 // pred_check_branch
          %436 = sbr.rel (%p434) target = $region68
        $region67: #{tpu_custom_call.1} parent=55 // pred_region
          %437 = dma.done [#allocation6], 32
        $region68: #{tpu_custom_call.1} parent=55 // pred_fallthru
          _
        %p438 = scmp.lt.s32.totalorder %s35, 1
        %s439 = scalar_select %p438, %s35, 1
        %p440 = scmp.lt.s32.totalorder %s36, 3
        %s441 = scalar_select %p440, %s36, 3
        %s442 = smul.addr %s439, 4
        %s443 = sadd.s32 %s441, %s442
        %s444 = smul.addr %s443, 4
        %s445 = scalar_lea.vmem %s0, %s444
        %p446 = pneg %p66
        %p447 = pneg %p63
        %p448 = scmp.lt.s32.totalorder %s36, 3
        %s449 = scalar_select %p448, %s36, 3
        %s450 = smul.addr %s449, 8
        %s451 = scalar_lea.vmem %s1, %s450
        %p452 = pneg %p92
        %p453 = pneg %p89
        %p454 = pneg %p118
        %p455 = pneg %p115
        %p456 = pneg %p144
        %p457 = pneg %p141
        %p458 = pneg %p165
        %p459 = pneg %p162
        %p460 = pneg %p186
        %p461 = pneg %p183
        %p462 = pneg %p207
        %p463 = pneg %p204
        %p464 = pneg %p228
        %p465 = pneg %p225
        %p466 = pneg %p249
        %p467 = pneg %p246
        %p468 = pneg %p277
        %p469 = pneg %p274
        %s470 = sand.u32 %s264, 1
        %s471 = scalar_lea.sflag [#allocation4], %s470
        %s472 = sand.u32 %s264, 1
        %s473 = smul.addr %s472, 8
        %s474 = scalar_lea.vmem [#allocation8], %s473
        %p475 = pneg %p305
        %p476 = pneg %p302
        %s477 = sand.u32 %s31, 1
        %s478 = scalar_lea.sflag [#allocation10], %s477
        %s479 = sand.u32 %s292, 1
        %s480 = smul.addr %s479, 8
        %s481 = scalar_lea.vmem [#allocation9], %s480
        %p482 = pneg %p333
        %p483 = pneg %p330
        %s484 = sand.u32 %s31, 1
        %s485 = scalar_lea.sflag [#allocation10], %s484
        %s486 = sand.u32 %s320, 1
        %s487 = smul.addr %s486, 8
        %s488 = scalar_lea.vmem [#allocation11], %s487
        %p489 = scmp.lt.s32.totalorder %s35, 1
        %s490 = scalar_select %p489, %s35, 1
        %p491 = scmp.lt.s32.totalorder %s36, 3
        %s492 = scalar_select %p491, %s36, 3
        %s493 = smul.addr %s490, 4
        %s494 = sadd.s32 %s492, %s493
        %s495 = smul.addr %s494, 4
        %s496 = scalar_lea.vmem %s0, %s495
        %p497 = scmp.lt.s32.totalorder %s36, 3
        %s498 = scalar_select %p497, %s36, 3
        %s499 = smul.addr %s498, 8
        %s500 = scalar_lea.vmem %s1, %s499
        %v502 = vld [vmem:[%s496] sm:$0xf]
        %v503 = vunpack.c.l.bf16 %v502
        %504 = vadd.xlane.f32.xlu0 %v503
        %v505 = vpop.xlane.xlu0 %504
        %v506 = vrcp.pop 128.0
        %v507 = vmul.f32 %v505, %v506
        %v508 = vsub.f32 %v503, %v507
        %v509 = vmul.f32 %v508, %v508
        %510 = vadd.xlane.f32.xlu0 %v509
        %v511 = vpop.xlane.xlu0 %510
        %v512 = vmul.f32 %v511, %v506
        %v513 = vadd.f32 %v512, 1e-06
        %v514 = vrsqrt.pop %v513
        %v515 = vmul.f32 %v508, %v514
        %v516 = vld [vmem:[#allocation5] sm:$0x1]
        %v517 = vadd.f32 %v516, 1.0
        %v519 = vlaneseq
        %v520 = vshrl.u32 %v519, 7
        %v521 = vsub.s32 0, %v520
        %v522 = vrot.slane %v517, %v521
        %v524 = vmul.f32 %v515, %v522
        %v525 = vld [vmem:[#allocation2] sm:$0x1]
        %v527 = vlaneseq
        %v528 = vshrl.u32 %v527, 7
        %v529 = vsub.s32 0, %v528
        %v530 = vrot.slane %v525, %v529
        %v532 = vadd.f32 %v524, %v530
        %v533 = vpack.c.bf16 %v532, %v532
        %v534 = vld [vmem:[%s4] sm:$0xff]
        %v535 = vld [vmem:[%s4 + $0x8] sm:$0xf]
        %v536 = vld [vmem:[%s4 + $0xc] sm:$0xff]
        %v537 = vld [vmem:[%s4 + $0x14] sm:$0xf]
        %v538 = vld [vmem:[%s4 + $0x18] sm:$0xff]
        %v539 = vld [vmem:[%s4 + $0x20] sm:$0xf]
        %v540 = vld [vmem:[%s4 + $0x24] sm:$0xff]
        %v541 = vld [vmem:[%s4 + $0x2c] sm:$0xf]
        %v542 = vld [vmem:[%s4 + $0x30] sm:$0xff]
        %v543 = vld [vmem:[%s4 + $0x38] sm:$0xf]
        %v544 = vld [vmem:[%s4 + $0x3c] sm:$0xff]
        %v545 = vld [vmem:[%s4 + $0x44] sm:$0xf]
        %v546 = vld [vmem:[%s4 + $0x48] sm:$0xff]
        %v547 = vld [vmem:[%s4 + $0x50] sm:$0xf]
        %v548 = vld [vmem:[%s4 + $0x54] sm:$0xff]
        %v549 = vld [vmem:[%s4 + $0x5c] sm:$0xf]
        %v550 = vld [vmem:[%s4 + $0x60] sm:$0xff]
        %v551 = vld [vmem:[%s4 + $0x68] sm:$0xf]
        %v552 = vld [vmem:[%s4 + $0x6c] sm:$0xff]
        %v553 = vld [vmem:[%s4 + $0x74] sm:$0xf]
        %v554 = vld [vmem:[%s4 + $0x78] sm:$0xff]
        %v555 = vld [vmem:[%s4 + $0x80] sm:$0xf]
        %v556 = vld [vmem:[%s4 + $0x84] sm:$0xff]
        %v557 = vld [vmem:[%s4 + $0x8c] sm:$0xf]
        %v558 = vld [vmem:[%s4 + $0x90] sm:$0xff]
        %v559 = vld [vmem:[%s4 + $0x98] sm:$0xf]
        %v560 = vld [vmem:[%s4 + $0x9c] sm:$0xff]
        %v561 = vld [vmem:[%s4 + $0xa4] sm:$0xf]
        %v562 = vld [vmem:[%s4 + $0xa8] sm:$0xff]
        %v563 = vld [vmem:[%s4 + $0xb0] sm:$0xf]
        %v564 = vld [vmem:[%s4 + $0xb4] sm:$0xff]
        %v565 = vld [vmem:[%s4 + $0xbc] sm:$0xf]
        %v566 = vld [vmem:[%s5] sm:$0x7]
        %v568 = vlaneseq
        %v569 = vshrl.u32 %v568, 7
        %v570 = vsub.s32 0, %v569
        %v571 = vrot.slane %v566, %v570
        %v572 = vlaneseq
        %v573 = vshrl.u32 %v572, 7
        %v574 = vsub.s32 1, %v573
        %v575 = vrot.slane %v566, %v574
        %v576 = vlaneseq
        %v577 = vshrl.u32 %v576, 7
        %v578 = vsub.s32 2, %v577
        %v579 = vrot.slane %v566, %v578
        %v615 = vunpack.c.l.b16 %v534
        %v616 = vunpack.c.h.b16 %v534
        %v617 = vunpack.c.l.b16 %v535
        %v618 = vunpack.c.l.b16 %v536
        %v619 = vunpack.c.h.b16 %v536
        %v620 = vunpack.c.l.b16 %v537
        %v621 = vunpack.c.l.b16 %v538
        %v622 = vunpack.c.h.b16 %v538
        %v623 = vunpack.c.l.b16 %v539
        %v624 = vunpack.c.l.b16 %v540
        %v625 = vunpack.c.h.b16 %v540
        %v626 = vunpack.c.l.b16 %v541
        %v627 = vunpack.c.l.b16 %v542
        %v628 = vunpack.c.h.b16 %v542
        %v629 = vunpack.c.l.b16 %v543
        %v630 = vunpack.c.l.b16 %v544
        %v631 = vunpack.c.h.b16 %v544
        %v632 = vunpack.c.l.b16 %v545
        %v633 = vunpack.c.l.b16 %v546
        %v634 = vunpack.c.h.b16 %v546
        %v635 = vunpack.c.l.b16 %v547
        %v636 = vunpack.c.l.b16 %v548
        %v637 = vunpack.c.h.b16 %v548
        %v638 = vunpack.c.l.b16 %v549
        %v639 = vunpack.c.l.b16 %v550
        %v640 = vunpack.c.h.b16 %v550
        %v641 = vunpack.c.l.b16 %v551
        %v642 = vunpack.c.l.b16 %v552
        %v643 = vunpack.c.h.b16 %v552
        %v644 = vunpack.c.l.b16 %v553
        %v645 = vunpack.c.l.b16 %v554
        %v646 = vunpack.c.h.b16 %v554
        %v647 = vunpack.c.l.b16 %v555
        %v648 = vunpack.c.l.b16 %v556
        %v649 = vunpack.c.h.b16 %v556
        %v650 = vunpack.c.l.b16 %v557
        %v651 = vunpack.c.l.b16 %v558
        %v652 = vunpack.c.h.b16 %v558
        %v653 = vunpack.c.l.b16 %v559
        %v654 = vunpack.c.l.b16 %v560
        %v655 = vunpack.c.h.b16 %v560
        %v656 = vunpack.c.l.b16 %v561
        %v657 = vunpack.c.l.b16 %v562
        %v658 = vunpack.c.h.b16 %v562
        %v659 = vunpack.c.l.b16 %v563
        %v660 = vunpack.c.l.b16 %v564
        %v661 = vunpack.c.h.b16 %v564
        %v662 = vunpack.c.l.b16 %v565
        %v663 = vpack.c.b16 %v618, %v615
        %v664 = vpack.c.b16 %v619, %v616
        %v665 = vpack.c.b16 %v620, %v617
        %v666 = vpack.c.b16 %v624, %v621
        %v667 = vpack.c.b16 %v625, %v622
        %v668 = vpack.c.b16 %v626, %v623
        %v669 = vpack.c.b16 %v630, %v627
        %v670 = vpack.c.b16 %v631, %v628
        %v671 = vpack.c.b16 %v632, %v629
        %v672 = vpack.c.b16 %v636, %v633
        %v673 = vpack.c.b16 %v637, %v634
        %v674 = vpack.c.b16 %v638, %v635
        %v675 = vpack.c.b16 %v642, %v639
        %v676 = vpack.c.b16 %v643, %v640
        %v677 = vpack.c.b16 %v644, %v641
        %v678 = vpack.c.b16 %v648, %v645
        %v679 = vpack.c.b16 %v649, %v646
        %v680 = vpack.c.b16 %v650, %v647
        %v681 = vpack.c.b16 %v654, %v651
        %v682 = vpack.c.b16 %v655, %v652
        %v683 = vpack.c.b16 %v656, %v653
        %v684 = vpack.c.b16 %v660, %v657
        %v685 = vpack.c.b16 %v661, %v658
        %v686 = vpack.c.b16 %v662, %v659
        %711 = vmatprep.subr.bf16.mxu0 %v685
        %712 = vmatpush1.bf16.msra.mxu0 %v684
        %713 = vmatprep.subr.bf16.mxu0 %v682
        %714 = vmatpush1.bf16.msra.mxu0 %v681
        %715 = vmatprep.subr.bf16.mxu0 %v679
        %716 = vmatpush1.bf16.msra.mxu0 %v678
        %717 = vmatprep.subr.bf16.mxu0 %v676
        %718 = vmatpush1.bf16.msra.mxu0 %v675
        %719 = vmatprep.subr.bf16.mxu0 %v673
        %720 = vmatpush1.bf16.msra.mxu0 %v672
        %721 = vmatprep.subr.bf16.mxu0 %v670
        %722 = vmatpush1.bf16.msra.mxu0 %v669
        %723 = vmatprep.subr.bf16.mxu0 %v667
        %724 = vmatpush1.bf16.msra.mxu0 %v666
        %725 = vmatprep.subr.bf16.mxu0 %v664
        %726 = vmatpush1.bf16.msra.mxu0 %v663
        %727 = vmatprep.subr.bf16.mxu0 0
        %728 = vmatpush2.bf16.msra.mxu0 0
        %729 = vmatprep.subr.bf16.mxu0 0
        %730 = vmatpush2.bf16.msra.mxu0 0
        %731 = vmatprep.subr.bf16.mxu0 0
        %732 = vmatpush2.bf16.msra.mxu0 0
        %733 = vmatprep.subr.bf16.mxu0 0
        %734 = vmatpush2.bf16.msra.mxu0 0
        %735 = vmatprep.subr.bf16.mxu0 0
        %736 = vmatpush2.bf16.msra.mxu0 0
        %737 = vmatprep.subr.bf16.mxu0 0
        %738 = vmatpush2.bf16.msra.mxu0 0
        %739 = vmatprep.subr.bf16.mxu0 0
        %740 = vmatpush2.bf16.msra.mxu0 0
        %741 = vmatprep.subr.bf16.mxu0 0
        %742 = vmatpush2.bf16.msra.mxu0 0
        %743 = vmatprep.mubr.bf16.mxu0 0
        %744 = vmatmul.mubr.bf16.gmra.mxu0 %v533
        %v745 = vpop.f32.mrf.mxu0
        %v746 = vadd.f32 %v571, %v745
        %v747 = vpop.f32.mrf.mxu0
        %v748 = vadd.f32 %v575, %v747
        %v749 = vpop.f32.mrf.mxu0
        %v750 = vpop.f32.mrf.mxu0
        %751 = vdwg.mxu0
        %752 = vmatprep.subr.bf16.mxu0 0
        %753 = vmatpush1.bf16.msra.mxu0 %v686
        %754 = vmatprep.subr.bf16.mxu0 0
        %755 = vmatpush1.bf16.msra.mxu0 %v683
        %756 = vmatprep.subr.bf16.mxu0 0
        %757 = vmatpush1.bf16.msra.mxu0 %v680
        %758 = vmatprep.subr.bf16.mxu0 0
        %759 = vmatpush1.bf16.msra.mxu0 %v677
        %760 = vmatprep.subr.bf16.mxu0 0
        %761 = vmatpush1.bf16.msra.mxu0 %v674
        %762 = vmatprep.subr.bf16.mxu0 0
        %763 = vmatpush1.bf16.msra.mxu0 %v671
        %764 = vmatprep.subr.bf16.mxu0 0
        %765 = vmatpush1.bf16.msra.mxu0 %v668
        %766 = vmatprep.subr.bf16.mxu0 0
        %767 = vmatpush1.bf16.msra.mxu0 %v665
        %768 = vmatprep.subr.bf16.mxu0 0
        %769 = vmatpush2.bf16.msra.mxu0 0
        %770 = vmatprep.subr.bf16.mxu0 0
        %771 = vmatpush2.bf16.msra.mxu0 0
        %772 = vmatprep.subr.bf16.mxu0 0
        %773 = vmatpush2.bf16.msra.mxu0 0
        %774 = vmatprep.subr.bf16.mxu0 0
        %775 = vmatpush2.bf16.msra.mxu0 0
        %776 = vmatprep.subr.bf16.mxu0 0
        %777 = vmatpush2.bf16.msra.mxu0 0
        %778 = vmatprep.subr.bf16.mxu0 0
        %779 = vmatpush2.bf16.msra.mxu0 0
        %780 = vmatprep.subr.bf16.mxu0 0
        %781 = vmatpush2.bf16.msra.mxu0 0
        %782 = vmatprep.subr.bf16.mxu0 0
        %783 = vmatpush2.bf16.msra.mxu0 0
        %784 = vmatprep.mubr.bf16.mxu0 0
        %785 = vmatmul.mubr.bf16.gmra.mxu0 %v533
        %v786 = vpop.f32.mrf.mxu0
        %v787 = vadd.f32 %v579, %v786
        %v788 = vpop.f32.mrf.mxu0
        %v789 = vpop.f32.mrf.mxu0
        %v790 = vpop.f32.mrf.mxu0
        %791 = vdwg.mxu0
        %v792 = vmul.f32 %v746, %v746
        %v793 = vmul.f32 %v748, %v748
        %v794 = vld [vmem:[%s7] sm:$0xff]
        %v795 = vld [vmem:[%s7 + $0x8] sm:$0xff]
        %v796 = vld [vmem:[%s7 + $0x10] sm:$0xff]
        %v797 = vld [vmem:[%s7 + $0x18] sm:$0xff]
        %v798 = vld [vmem:[%s7 + $0x20] sm:$0xff]
        %v799 = vld [vmem:[%s7 + $0x28] sm:$0xff]
        %v800 = vld [vmem:[%s7 + $0x30] sm:$0xff]
        %v801 = vld [vmem:[%s7 + $0x38] sm:$0xff]
        %v802 = vld [vmem:[%s7 + $0x40] sm:$0xff]
        %v803 = vld [vmem:[%s7 + $0x48] sm:$0xff]
        %v804 = vld [vmem:[%s7 + $0x50] sm:$0xff]
        %v805 = vld [vmem:[%s7 + $0x58] sm:$0xff]
        %v806 = vld [vmem:[%s7 + $0x60] sm:$0xff]
        %v807 = vld [vmem:[%s7 + $0x68] sm:$0xff]
        %v808 = vld [vmem:[%s7 + $0x70] sm:$0xff]
        %v809 = vld [vmem:[%s7 + $0x78] sm:$0xff]
        %v810 = vld [vmem:[%s7 + $0x80] sm:$0xff]
        %v811 = vld [vmem:[%s7 + $0x88] sm:$0xff]
        %v812 = vld [vmem:[%s7 + $0x90] sm:$0xff]
        %v813 = vld [vmem:[%s7 + $0x98] sm:$0xff]
        %v814 = vld [vmem:[%s7 + $0xa0] sm:$0xff]
        %v815 = vld [vmem:[%s7 + $0xa8] sm:$0xff]
        %v816 = vld [vmem:[%s7 + $0xb0] sm:$0xff]
        %v817 = vld [vmem:[%s7 + $0xb8] sm:$0xff]
        %v818 = vld [vmem:[%s7 + $0xc0] sm:$0xff]
        %v819 = vld [vmem:[%s7 + $0xc8] sm:$0xff]
        %v820 = vld [vmem:[%s7 + $0xd0] sm:$0xff]
        %v821 = vld [vmem:[%s7 + $0xd8] sm:$0xff]
        %v822 = vld [vmem:[%s7 + $0xe0] sm:$0xff]
        %v823 = vld [vmem:[%s7 + $0xe8] sm:$0xff]
        %v824 = vld [vmem:[%s7 + $0xf0] sm:$0xff]
        %v825 = vld [vmem:[%s7 + $0xf8] sm:$0xff]
        %826 = vmatprep.subr.mxu0 0.0
        %827 = vmatpush1.msra.mxu0 %v809
        %828 = vmatprep.subr.mxu0 0.0
        %829 = vmatpush1.msra.mxu0 %v808
        %830 = vmatprep.subr.mxu0 0.0
        %831 = vmatpush1.msra.mxu0 %v807
        %832 = vmatprep.subr.mxu0 0.0
        %833 = vmatpush1.msra.mxu0 %v806
        %834 = vmatprep.subr.mxu0 0.0
        %835 = vmatpush1.msra.mxu0 %v805
        %836 = vmatprep.subr.mxu0 0.0
        %837 = vmatpush1.msra.mxu0 %v804
        %838 = vmatprep.subr.mxu0 0.0
        %839 = vmatpush1.msra.mxu0 %v803
        %840 = vmatprep.subr.mxu0 0.0
        %841 = vmatpush1.msra.mxu0 %v802
        %842 = vmatprep.subr.mxu0 0.0
        %843 = vmatpush1.msra.mxu0 %v801
        %844 = vmatprep.subr.mxu0 0.0
        %845 = vmatpush1.msra.mxu0 %v800
        %846 = vmatprep.subr.mxu0 0.0
        %847 = vmatpush1.msra.mxu0 %v799
        %848 = vmatprep.subr.mxu0 0.0
        %849 = vmatpush1.msra.mxu0 %v798
        %850 = vmatprep.subr.mxu0 0.0
        %851 = vmatpush1.msra.mxu0 %v797
        %852 = vmatprep.subr.mxu0 0.0
        %853 = vmatpush1.msra.mxu0 %v796
        %854 = vmatprep.subr.mxu0 0.0
        %855 = vmatpush1.msra.mxu0 %v795
        %856 = vmatprep.subr.mxu0 0.0
        %857 = vmatpush1.msra.mxu0 %v794
        %858 = vmatprep.subr.mxu0 0.0
        %859 = vmatpush2.msra.mxu0 %v825
        %860 = vmatprep.subr.mxu0 0.0
        %861 = vmatpush2.msra.mxu0 %v824
        %862 = vmatprep.subr.mxu0 0.0
        %863 = vmatpush2.msra.mxu0 %v823
        %864 = vmatprep.subr.mxu0 0.0
        %865 = vmatpush2.msra.mxu0 %v822
        %866 = vmatprep.subr.mxu0 0.0
        %867 = vmatpush2.msra.mxu0 %v821
        %868 = vmatprep.subr.mxu0 0.0
        %869 = vmatpush2.msra.mxu0 %v820
        %870 = vmatprep.subr.mxu0 0.0
        %871 = vmatpush2.msra.mxu0 %v819
        %872 = vmatprep.subr.mxu0 0.0
        %873 = vmatpush2.msra.mxu0 %v818
        %874 = vmatprep.subr.mxu0 0.0
        %875 = vmatpush2.msra.mxu0 %v817
        %876 = vmatprep.subr.mxu0 0.0
        %877 = vmatpush2.msra.mxu0 %v816
        %878 = vmatprep.subr.mxu0 0.0
        %879 = vmatpush2.msra.mxu0 %v815
        %880 = vmatprep.subr.mxu0 0.0
        %881 = vmatpush2.msra.mxu0 %v814
        %882 = vmatprep.subr.mxu0 0.0
        %883 = vmatpush2.msra.mxu0 %v813
        %884 = vmatprep.subr.mxu0 0.0
        %885 = vmatpush2.msra.mxu0 %v812
        %886 = vmatprep.subr.mxu0 0.0
        %887 = vmatpush2.msra.mxu0 %v811
        %888 = vmatprep.subr.mxu0 0.0
        %889 = vmatpush2.msra.mxu0 %v810
        %890 = vmatprep.mubr.f32.mxu0 %v793
        %891 = vmatmul.mubr.f32.gmra.mxu0 %v792
        %v892 = vpop.f32.mrf.mxu0
        %v893 = vadd.f32 1e-06, %v892
        %v894 = vpop.f32.mrf.mxu0
        %895 = vdwg.mxu0
        %v896 = vrsqrt.pop %v893
        %v897 = vld [vmem:[%s8] sm:$0xff]
        %v899 = vcombine.high %v897, %v897
        %vm900 = vcmask 31744
        %v902 = vsel %vm900, %v896, 0
        %vm904 = vcmask 1043456
        %v905 = vsel %vm904, %v897, 0
        %v907 = vsel %vm904, %v899, 0
        %909 = vmatprep.subr.mxu0 0.0
        %910 = vmatpush1.msra.mxu0 0.0
        %911 = vmatprep.subr.mxu0 0.0
        %912 = vmatpush1.msra.mxu0 0.0
        %913 = vmatprep.subr.mxu0 0.0
        %914 = vmatpush1.msra.mxu0 0.0
        %915 = vmatprep.subr.mxu0 0.0
        %916 = vmatpush1.msra.mxu0 0.0
        %917 = vmatprep.subr.mxu0 0.0
        %918 = vmatpush1.msra.mxu0 0.0
        %919 = vmatprep.subr.mxu0 0.0
        %920 = vmatpush1.msra.mxu0 0.0
        %921 = vmatprep.subr.mxu0 0.0
        %922 = vmatpush1.msra.mxu0 0.0
        %923 = vmatprep.subr.mxu0 0.0
        %924 = vmatpush1.msra.mxu0 0.0
        %925 = vmatprep.subr.mxu0 0.0
        %926 = vmatpush1.msra.mxu0 0.0
        %927 = vmatprep.subr.mxu0 0.0
        %928 = vmatpush1.msra.mxu0 0.0
        %929 = vmatprep.subr.mxu0 0.0
        %930 = vmatpush1.msra.mxu0 0.0
        %931 = vmatprep.subr.mxu0 0.0
        %932 = vmatpush1.msra.mxu0 0.0
        %933 = vmatprep.subr.mxu0 0.0
        %934 = vmatpush1.msra.mxu0 0.0
        %935 = vmatprep.subr.mxu0 0.0
        %936 = vmatpush1.msra.mxu0 0.0
        %937 = vmatprep.subr.mxu0 0.0
        %938 = vmatpush1.msra.mxu0 0.0
        %939 = vmatprep.subr.mxu0 %v907
        %940 = vmatpush1.msra.mxu0 %v905
        %941 = vmatprep.subr.mxu0 0.0
        %942 = vmatpush2.msra.mxu0 0.0
        %943 = vmatprep.subr.mxu0 0.0
        %944 = vmatpush2.msra.mxu0 0.0
        %945 = vmatprep.subr.mxu0 0.0
        %946 = vmatpush2.msra.mxu0 0.0
        %947 = vmatprep.subr.mxu0 0.0
        %948 = vmatpush2.msra.mxu0 0.0
        %949 = vmatprep.subr.mxu0 0.0
        %950 = vmatpush2.msra.mxu0 0.0
        %951 = vmatprep.subr.mxu0 0.0
        %952 = vmatpush2.msra.mxu0 0.0
        %953 = vmatprep.subr.mxu0 0.0
        %954 = vmatpush2.msra.mxu0 0.0
        %955 = vmatprep.subr.mxu0 0.0
        %956 = vmatpush2.msra.mxu0 0.0
        %957 = vmatprep.subr.mxu0 0.0
        %958 = vmatpush2.msra.mxu0 0.0
        %959 = vmatprep.subr.mxu0 0.0
        %960 = vmatpush2.msra.mxu0 0.0
        %961 = vmatprep.subr.mxu0 0.0
        %962 = vmatpush2.msra.mxu0 0.0
        %963 = vmatprep.subr.mxu0 0.0
        %964 = vmatpush2.msra.mxu0 0.0
        %965 = vmatprep.subr.mxu0 0.0
        %966 = vmatpush2.msra.mxu0 0.0
        %967 = vmatprep.subr.mxu0 0.0
        %968 = vmatpush2.msra.mxu0 0.0
        %969 = vmatprep.subr.mxu0 0.0
        %970 = vmatpush2.msra.mxu0 0.0
        %971 = vmatprep.subr.mxu0 0.0
        %972 = vmatpush2.msra.mxu0 0.0
        %973 = vmatprep.mubr.f32.mxu0 0.0
        %974 = vmatmul.mubr.f32.gmra.mxu0 %v902
        %v975 = vpop.f32.mrf.mxu0
        %v976 = vadd.f32 0.0, %v975
        %v977 = vpop.f32.mrf.mxu0
        %v978 = vadd.f32 0.0, %v977
        %979 = vdwg.mxu0
        %v980 = vmul.f32 %v746, %v976
        %v981 = vmul.f32 %v748, %v978
        %v982 = vld [vmem:[#allocation7] sm:$0x3]
        %v984 = vlaneseq
        %v985 = vshrl.u32 %v984, 7
        %v986 = vsub.s32 0, %v985
        %v987 = vrot.slane %v982, %v986
        %v988 = vlaneseq
        %v989 = vshrl.u32 %v988, 7
        %v990 = vsub.s32 1, %v989
        %v991 = vrot.slane %v982, %v990
        %v994 = vmul.f32 %v980, %v987
        %v995 = vmul.f32 %v981, %v991
        %v996 = vld [vmem:[%s500] sm:$0xff]
        %998 = vrot.lane.b32.xlu0 %v996, 64
        %v999 = vpop.permute.xlu0 %998
        %vm1001 = vcmask 523264
        %v1002 = vsel %vm1001, %v996, %v999
        %v1003 = vsel %vm1001, %v999, %v996
        %1006 = vrot.lane.b32.xlu0 %v994, 96
        %v1007 = vpop.permute.xlu0 %1006
        %1008 = vrot.lane.b32.xlu0 %v995, 96
        %v1009 = vpop.permute.xlu0 %1008
        %vm1010 = vcmask 785408
        %v1011 = vsel %vm1010, %v1007, %v1009
        %v1015 = vsel %vm1010, %v1009, %v1007
        %1016 = vrot.lane.b32.xlu0 %v995, 32
        %v1017 = vpop.permute.xlu0 %1016
        %1019 = vrot.lane.b32.xlu0 %v994, 32
        %v1020 = vpop.permute.xlu0 %1019
        %vm1021 = vcmask 261120
        %v1022 = vsel %vm1021, %v1020, %v1017
        %v1025 = vsel %vm1021, %v1017, %v1020
        %v1026 = vlaneseq
        %v1027 = vand.u32 %v1026, 127
        %v1028 = vadd.s32 %v1027, 128
        %vm1029 = vcmp.lt.s32.totalorder %v1027, 0
        %v1030 = vsub.s32 0, %v1027
        %v1031 = vsel %vm1029, %v1030, %v1027
        %v1032 = vshrl.u32 %v1031, 6
        %v1033 = vand.u32 %v1031, 63
        %v1034 = vsub.s32 0, %v1033
        %v1035 = vsel %vm1029, %v1034, %v1033
        %vm1036 = vcmp.lt.s32.totalorder %v1028, 0
        %v1037 = vsub.s32 0, %v1028
        %v1038 = vsel %vm1036, %v1037, %v1028
        %v1039 = vshrl.u32 %v1038, 6
        %v1040 = vand.u32 %v1038, 63
        %v1041 = vsub.s32 0, %v1040
        %v1042 = vsel %vm1036, %v1041, %v1040
        %vm1043 = vcmp.ne.s32.totalorder %v1035, 0
        %vm1044 = vcmp.ne.s32.totalorder %v1042, 0
        %vm1045 = vcmp.lt.s32.totalorder %v1035, 0
        %vm1046 = vcmp.lt.s32.totalorder %v1042, 0
        %vm1047 = vmand %vm1045, %vm1043
        %vm1048 = vmand %vm1046, %vm1044
        %v1049 = vadd.s32 %v1035, 64
        %v1050 = vadd.s32 %v1042, 64
        %v1051 = vsel %vm1047, %v1049, %v1035
        %v1052 = vsel %vm1048, %v1050, %v1042
        %vm1053 = vcmp.lt.s32.totalorder %v1051, 32
        %vm1054 = vcmp.lt.s32.totalorder %v1052, 32
        %v1055 = vsel %vm1053, 1, 0
        %v1056 = vsel %vm1054, 1, 0
        %vm1057 = vcmp.eq.s32.totalorder %v1055, 1
        %vm1058 = vcmp.eq.s32.totalorder %v1056, 1
        %v1059 = vsel %vm1057, %v1011, %v1025
        %v1060 = vsel %vm1058, %v1015, %v1022
        %v1061 = vmul.f32 %v994, %v1002
        %v1062 = vmul.f32 %v995, %v1002
        %v1063 = vmul.f32 %v1059, %v1003
        %v1064 = vmul.f32 %v1060, %v1003
        %v1065 = vadd.f32 %v1061, %v1063
        %v1066 = vadd.f32 %v1062, %v1064
        %v1067 = vpack.c.bf16 %v1065, %v1065
        %v1068 = vpack.c.bf16 %v1066, %v1066
        %v1069 = vpack.c.bf16 %v787, %v787
        %vm1070 = vcmask 519168
        %1071 = vst.msk [vmem:[%s474] sm:$0xf] %vm1070, %v1067
        %1072 = vst.msk [vmem:[%s481] sm:$0xf] %vm1070, %v1068
        %1073 = vst.msk [vmem:[%s488] sm:$0xf] %vm1070, %v1069
        %v1075 = vunpack.c.l.b16 %v1067
        %v1076 = vpack.c.b16 %v1075, %v1075
        %1077 = vrot.lane.b32.xlu0 %v1076, 64
        %v1078 = vpop.permute.xlu0 %1077
        %s1080 = scalar_lea.vmem %s474, 4 [#allocation8]
        %1081 = vst.msk [vmem:[%s1080] sm:$0xf] %vm1070, %v1078
        %v1083 = vunpack.c.l.b16 %v1068
        %v1084 = vpack.c.b16 %v1083, %v1083
        %1085 = vrot.lane.b32.xlu0 %v1084, 64
        %v1086 = vpop.permute.xlu0 %1085
        %s1088 = scalar_lea.vmem %s481, 4 [#allocation9]
        %1089 = vst.msk [vmem:[%s1088] sm:$0xf] %vm1070, %v1086
        %v1091 = vunpack.c.l.b16 %v1069
        %v1092 = vpack.c.b16 %v1091, %v1091
        %1093 = vrot.lane.b32.xlu0 %v1092, 64
        %v1094 = vpop.permute.xlu0 %1093
        %s1096 = scalar_lea.vmem %s488, 4 [#allocation11]
        %1097 = vst.msk [vmem:[%s1096] sm:$0xf] %vm1070, %v1094
        %s1098 = sand.u32 %s264, 1
        %s1099 = scalar_lea.sflag [#allocation4], %s1098
        %s1100 = sand.u32 %s264, 1
        %s1101 = smul.addr %s1100, 8
        %s1102 = scalar_lea.vmem [#allocation8], %s1101
        %s1103 = sand.u32 %s31, 1
        %s1104 = scalar_lea.sflag [#allocation10], %s1103
        %s1105 = sand.u32 %s292, 1
        %s1106 = smul.addr %s1105, 8
        %s1107 = scalar_lea.vmem [#allocation9], %s1106
        %s1108 = sand.u32 %s31, 1
        %s1109 = scalar_lea.sflag [#allocation10], %s1108
        %s1110 = sand.u32 %s320, 1
        %s1111 = smul.addr %s1110, 8
        %s1112 = scalar_lea.vmem [#allocation11], %s1111
        // Predicated region
        $region69: #{tpu_custom_call.1} parent=55 // pred_check
          %p1113 = pneg %p274
        $region70: #{tpu_custom_call.1} parent=55 // pred_check_branch
          %1115 = sbr.rel (%p1113) target = $region72
        $region71: #{tpu_custom_call.1} parent=55 // pred_region
          %s1117 = ssub.s32 128, 128
          %1118 = vsyncadd %s1099, %s1117
          %s1119 = smul.addr %s35, 8
          %s1120 = sadd.s32 %s36, %s1119
          %s1121 = smul.addr %s1120, 64
          %s1122 = scalar_lea.hbm %s9, %s1121
          %s1123 = sshll.u32 %s1102, 4
          %s1124 = int_to_ptr.vmem [resolvable:$true] %s1123
          %1129 = dma.vmem_to_hbm [thread:$0]  %s1124, 128, %s1122, %s1099, 64, 256, 4
        $region72: #{tpu_custom_call.1} parent=55 // pred_fallthru
          _
        // Predicated region
        $region73: #{tpu_custom_call.1} parent=55 // pred_check
          %p1130 = pneg %p302
        $region74: #{tpu_custom_call.1} parent=55 // pred_check_branch
          %1132 = sbr.rel (%p1130) target = $region76
        $region75: #{tpu_custom_call.1} parent=55 // pred_region
          %s1134 = ssub.s32 128, 128
          %1135 = vsyncadd %s1104, %s1134
          %s1136 = smul.addr %s35, 8
          %s1137 = sadd.s32 %s36, %s1136
          %s1138 = smul.addr %s1137, 64
          %s1139 = scalar_lea.hbm %s10, %s1138
          %s1140 = sshll.u32 %s1107, 4
          %s1141 = int_to_ptr.vmem [resolvable:$true] %s1140
          %1146 = dma.vmem_to_hbm [thread:$0]  %s1141, 128, %s1139, %s1104, 64, 256, 4
        $region76: #{tpu_custom_call.1} parent=55 // pred_fallthru
          _
        // Predicated region
        $region77: #{tpu_custom_call.1} parent=55 // pred_check
          %p1147 = pneg %p330
        $region78: #{tpu_custom_call.1} parent=55 // pred_check_branch
          %1149 = sbr.rel (%p1147) target = $region80
        $region79: #{tpu_custom_call.1} parent=55 // pred_region
          %s1151 = ssub.s32 128, 128
          %1152 = vsyncadd %s1109, %s1151
          %s1153 = smul.addr %s35, 8
          %s1154 = sadd.s32 %s36, %s1153
          %s1155 = smul.addr %s1154, 64
          %s1156 = scalar_lea.hbm %s11, %s1155
          %s1157 = sshll.u32 %s1112, 4
          %s1158 = int_to_ptr.vmem [resolvable:$true] %s1157
          %1163 = dma.vmem_to_hbm [thread:$0]  %s1158, 128, %s1156, %s1109, 64, 256, 4
        $region80: #{tpu_custom_call.1} parent=55 // pred_fallthru
          _
      $region56: #{tpu_custom_call.1} parent=5 // pred_fallthru
        _
      %p1164 = scmp.le.s32.totalorder 2, %s26
      // Predicated region
      $region81: #{tpu_custom_call.1} parent=5 // pred_check
        %p1165 = pneg %p1164
      $region82: #{tpu_custom_call.1} parent=5 // pred_check_branch
        %1167 = sbr.rel (%p1165) target = $region84
      $region83: #{tpu_custom_call.1} parent=5 // pred_region
        %s1168 = ssub.s32 %s26, 2
        // Predicated region
        $region85: #{tpu_custom_call.1} parent=83 // pred_check
          %p1169 = pneg %p280
        $region86: #{tpu_custom_call.1} parent=83 // pred_check_branch
          %1171 = sbr.rel (%p1169) target = $region88
        $region87: #{tpu_custom_call.1} parent=83 // pred_region
          %s1172 = sand.u32 %s265, 1
          %s1173 = scalar_lea.sflag [#allocation4], %s1172
          %s1174 = sand.u32 %s265, 1
          %s1175 = smul.addr %s1174, 8
          %s1176 = scalar_lea.vmem [#allocation8], %s1175
          %1177 = dma.done %s1173, 128
        $region88: #{tpu_custom_call.1} parent=83 // pred_fallthru
          _
        // Predicated region
        $region89: #{tpu_custom_call.1} parent=83 // pred_check
          %p1178 = pneg %p308
        $region90: #{tpu_custom_call.1} parent=83 // pred_check_branch
          %1180 = sbr.rel (%p1178) target = $region92
        $region91: #{tpu_custom_call.1} parent=83 // pred_region
          %s1181 = sand.u32 %s32, 1
          %s1182 = scalar_lea.sflag [#allocation10], %s1181
          %s1183 = sand.u32 %s293, 1
          %s1184 = smul.addr %s1183, 8
          %s1185 = scalar_lea.vmem [#allocation9], %s1184
          %1186 = dma.done %s1182, 128
        $region92: #{tpu_custom_call.1} parent=83 // pred_fallthru
          _
        // Predicated region
        $region93: #{tpu_custom_call.1} parent=83 // pred_check
          %p1187 = pneg %p336
        $region94: #{tpu_custom_call.1} parent=83 // pred_check_branch
          %1189 = sbr.rel (%p1187) target = $region96
        $region95: #{tpu_custom_call.1} parent=83 // pred_region
          %s1190 = sand.u32 %s32, 1
          %s1191 = scalar_lea.sflag [#allocation10], %s1190
          %s1192 = sand.u32 %s321, 1
          %s1193 = smul.addr %s1192, 8
          %s1194 = scalar_lea.vmem [#allocation11], %s1193
          %1195 = dma.done %s1191, 128
        $region96: #{tpu_custom_call.1} parent=83 // pred_fallthru
          _
      $region84: #{tpu_custom_call.1} parent=5 // pred_fallthru
        _
    $region6: #{tpu_custom_call.1} parent=1 // loop_footer
      %s30 = sadd.s32 1, %s26
    $region7: #{tpu_custom_call.1} parent=1 // loop_footer_branch
      %25 = sbr.rel target = $region3
    $region8: #{tpu_custom_call.1} parent=1 // loop_exit
      _
    %1196 = vsyncpa [#allocation3], 1
    %s1197 = scalar_lea.sflag [#allocation3], 1
    %1198 = vsyncpa %s1197, 1
    %1199 = vsyncpa [#allocation6], 1
    %1200 = vsyncpa [#allocation4], 1
    %s1201 = scalar_lea.sflag [#allocation4], 1
    %1202 = vsyncpa %s1201, 1
    %1203 = vsyncpa [#allocation10], 1
    %s1204 = scalar_lea.sflag [#allocation10], 1
    %1205 = vsyncpa %s1204, 1

</llo_original>
